<compile_context>
chip_gen: v7x
topology: tpu7x:2x2x1
jax: 0.10.0
libtpu: 0.0.40
codegen_flags: <defaults>
</compile_context>

<pallas_src>
import functools

import jax
import jax.numpy as jnp
from jax import lax
from jax.experimental import pallas as pl
from jax.experimental.pallas import tpu as pltpu

_LANES = 128
_ACC_ROWS = 32                     # f32 accumulator rows per core (4 vregs / lane col)
_TARGET_BLOCK_BYTES = 4 << 20      # ~4 MiB per input block
_CAST_CHUNK_ROWS = 512             # sub-chunk rows for sub-32-bit upcast folds
_PALLAS_MIN_ELEMS = 262144         # below this, plain jnp reduce wins


def _round_up(v: int, m: int) -> int:
    return (v + m - 1) // m * m


def _tpu_cores_and_v7():
    """(#TensorCores to split over, is_v7) from the device kind string."""
    try:
        kind = jax.devices()[0].device_kind.lower()
    except Exception:
        return 1, False
    if "v7" in kind:
        return 2, True
    # v4 / v5p expose 2 TensorCores per device (megacore); the "lite" chips
    # (v5e / v6e) and anything unknown get a single sequential pass.
    if ("v4" in kind or "v5p" in kind) and "lite" not in kind:
        return 2, False
    return 1, False


def _partial_sum_kernel(x_ref, o_ref, *, rows: int, block_rows: int,
                        blocks_per_core: int, acc_rows: int,
                        chunk_sizes: tuple):
    """Per-core partial sums: fold (block_rows,128) tiles into a resident
    (acc_rows,128) f32 accumulator block."""
    c = pl.program_id(0)   # core split axis ("parallel")
    i = pl.program_id(1)   # reduction axis ("arbitrary")

    @pl.when(i == 0)
    def _():
        o_ref[...] = jnp.zeros_like(o_ref)

    # Global row offset this (c, i) step *claims* (un-clamped).  The input
    # index_map clamps the block index so the DMA always reads a valid block;
    # duplicated / ragged rows are zeroed (or skipped) by the masking below.
    row0 = (c * blocks_per_core + i) * block_rows
    full = row0 + block_rows <= rows

    # ---- hot path: block entirely in range -> unmasked chunked fold -------
    @pl.when(full)
    def _():
        acc = jnp.zeros((acc_rows, _LANES), jnp.float32)
        start = 0
        for csize in chunk_sizes:            # static unroll; cast stays per-chunk
            xc = x_ref[pl.ds(start, csize), :].astype(jnp.float32)
            acc = acc + xc.reshape(-1, acc_rows, _LANES).sum(axis=0)
            start += csize
        o_ref[...] += acc

    # ---- cold path: ragged trailing block (mask only the boundary sub-tile)
    @pl.when(jnp.logical_and(jnp.logical_not(full), row0 < rows))
    def _():
        n_sub = block_rows // acc_rows

        def body(j, carry):
            start = pl.multiple_of(j * acc_rows, acc_rows)
            c0 = row0 + start

            @pl.when(c0 + acc_rows <= rows)          # fully valid sub-tile
            def _():
                o_ref[...] += x_ref[pl.ds(start, acc_rows), :].astype(jnp.float32)

            @pl.when(jnp.logical_and(c0 < rows, c0 + acc_rows > rows))
            def _():                                  # boundary sub-tile only
                r = lax.broadcasted_iota(jnp.int32, (acc_rows, _LANES), 0) + c0
                xc = x_ref[pl.ds(start, acc_rows), :].astype(jnp.float32)
                o_ref[...] += jnp.where(r < rows, xc, 0.0)

            # sub-tiles fully past `rows` (clamped duplicate blocks) do nothing
            return carry

        lax.fori_loop(0, n_sub, body, 0)


def _neg_mean_pallas(x: jax.Array) -> jax.Array:
    """-mean(x) via a Pallas grid-accumulated sum reduction (large x only)."""
    n_total = x.size
    flat = x.reshape(-1)

    # Lane alignment: keep the bulk zero-copy (reshape only) when n_total is a
    # multiple of 128 (the common case); otherwise sum the tiny (<128 elem)
    # tail with jnp.  No full-tensor pad copy in either case.
    rem = n_total % _LANES
    n_bulk = n_total - rem
    tail_sum = (jnp.sum(flat[n_bulk:].astype(jnp.float32))
                if rem else jnp.float32(0.0))
    bulk = flat[:n_bulk] if rem else flat
    rows = n_bulk // _LANES
    if rows == 0:  # nothing for the kernel to do
        return -(tail_sum) / jnp.float32(n_total)
    x2d = bulk.reshape(rows, _LANES)

    itemsize = int(jnp.dtype(x.dtype).itemsize)
    # Row quantum: multiple of both the accumulator rows and the packed
    # sublane tile (16 for bf16, 32 for int8/fp8) -> unmasked, lowerable loads.
    packed_sublanes = max(8, 32 // max(itemsize, 1))
    row_quantum = max(_ACC_ROWS, packed_sublanes)

    target_rows = _TARGET_BLOCK_BYTES // (_LANES * itemsize)
    block_rows = max(row_quantum, target_rows // row_quantum * row_quantum)
    block_rows = min(block_rows, _round_up(rows, row_quantum))

    nblocks = pl.cdiv(rows, block_rows)
    ncores, is_v7 = _tpu_cores_and_v7()
    ncores = min(ncores, nblocks)          # no core split for a single block
    bpc = pl.cdiv(nblocks, ncores)         # blocks per core

    # Chunking of the unmasked fold: single chunk for 32-bit inputs; 512-row
    # sub-chunks for packed dtypes so the f32 upcast temp stays small.
    if itemsize >= 4:
        chunk = block_rows
    else:
        chunk = min(block_rows, max(row_quantum,
                                    _CAST_CHUNK_ROWS // row_quantum * row_quantum))
    chunk_sizes = []
    left = block_rows
    while left > 0:
        csz = min(chunk, left)
        chunk_sizes.append(csz)
        left -= csz
    chunk_sizes = tuple(chunk_sizes)

    # Input pipeline depth: 3 on v7x (short DMAs), default 2 elsewhere.
    n_buf = 3 if is_v7 else 2
    idx_map = lambda c, i: (jnp.minimum(c * bpc + i, nblocks - 1), 0)
    in_spec = pl.BlockSpec((block_rows, _LANES), idx_map)
    if is_v7:
        try:
            in_spec = pl.BlockSpec((block_rows, _LANES), idx_map,
                                   pipeline_mode=pl.Buffered(n_buf))
        except Exception:
            in_spec = pl.BlockSpec((block_rows, _LANES), idx_map)  # fallback

    block_bytes = block_rows * _LANES * itemsize
    out_bytes = 2 * ncores * _ACC_ROWS * _LANES * 4
    vmem_limit = int(n_buf * block_bytes + out_bytes + (16 << 20))  # +headroom

    partials = pl.pallas_call(
        functools.partial(_partial_sum_kernel, rows=rows,
                          block_rows=block_rows, blocks_per_core=bpc,
                          acc_rows=_ACC_ROWS, chunk_sizes=chunk_sizes),
        out_shape=jax.ShapeDtypeStruct((ncores * _ACC_ROWS, _LANES), jnp.float32),
        grid_spec=pltpu.PrefetchScalarGridSpec(
            num_scalar_prefetch=0,
            grid=(ncores, bpc),
            in_specs=[in_spec],
            out_specs=pl.BlockSpec((_ACC_ROWS, _LANES), lambda c, i: (c, 0)),
        ),
        compiler_params=pltpu.CompilerParams(
            dimension_semantics=("parallel", "arbitrary"),
            vmem_limit_bytes=vmem_limit,
        ),
        cost_estimate=pl.CostEstimate(
            flops=n_bulk,
            transcendentals=0,
            bytes_accessed=n_bulk * itemsize + ncores * _ACC_ROWS * _LANES * 4),
    )(x2d)

    total = jnp.sum(partials, dtype=jnp.float32) + tail_sum
    return -total / jnp.float32(n_total)


def _neg_mean(x: jax.Array) -> jax.Array:
    """-mean(x); Pallas for large tensors, plain jnp for small/medium ones."""
    if x.size < _PALLAS_MIN_ELEMS:
        return -jnp.mean(x, dtype=jnp.float32)
    return _neg_mean_pallas(x)


class CriterionAdvForG:
    """JAX/Pallas port of the PyTorch CriterionAdvForG module."""

    def __init__(self, adv_type: str):
        if adv_type != "wgan-gp" and adv_type != "hinge":
            raise ValueError("adv_type should be wgan-gp or hinge")
        self.adv_loss = adv_type

    def __call__(self, d_out_S):
        g_out_fake = d_out_S[0]
        if self.adv_loss == "wgan-gp":
            return _neg_mean(g_out_fake)
        elif self.adv_loss == "hinge":
            return _neg_mean(g_out_fake)
        else:
            raise ValueError("args.adv_loss should be wgan-gp or hinge")


if __name__ == "__main__":
    key = jax.random.PRNGKey(0)
    k1, k2, k3, k4, k5 = jax.random.split(key, 5)

    crit_hinge = CriterionAdvForG("hinge")
    crit_wgan = CriterionAdvForG("wgan-gp")

    def _check(loss, x, atol=1e-5, rtol=1e-4):
        ref = -jnp.mean(x.astype(jnp.float32))
        assert jnp.allclose(loss, ref, atol=atol, rtol=rtol), (loss, ref)

    # 1) Small discriminator output (NCHW) -> jnp fast path.
    x_small = jax.random.normal(k1, (2, 4, 16, 16), dtype=jnp.float32)
    _check(jax.block_until_ready(crit_hinge((x_small,))), x_small)
    _check(jax.block_until_ready(crit_wgan((x_small,))), x_small)

    # 2) Medium f32 output -> Pallas path, single full block.
    x_med = jax.random.normal(k2, (2, 4, 256, 256), dtype=jnp.float32)
    _check(jax.block_until_ready(crit_hinge((x_med,))), x_med)

    # 3) Larger f32 output -> multiple full blocks along the reduction axis.
    x_big = jax.random.normal(k3, (4, 4, 512, 512), dtype=jnp.float32)
    _check(jax.block_until_ready(crit_wgan((x_big,))), x_big)

    # 4) Non-128-divisible element count -> jnp lane tail + in-kernel masked
    #    boundary sub-tile of the ragged trailing block.
    x_rag = jax.random.normal(k4, (3, 5, 131, 137), dtype=jnp.float32)
    _check(jax.block_until_ready(crit_hinge((x_rag,))), x_rag)

    # 5) bf16 discriminator output -> native-dtype streaming, chunked f32
    #    accumulation (no full-block f32 temporary), multiple blocks.
    x_bf16 = jax.random.normal(k5, (8, 4, 512, 512), dtype=jnp.bfloat16)
    _check(jax.block_until_ready(crit_wgan((x_bf16,))), x_bf16)

    print("KERNEL_OK")
</pallas_src>

<mosaic_0001>
module attributes {stable_mosaic.version = 11 : i64} {
  func.func @_partial_sum_kernel(%arg0: i32, %arg1: i32, %arg2: memref<4096x128xf32, #tpu.memory_space<vmem>>, %arg3: memref<32x128xf32, #tpu.memory_space<vmem>>) attributes {dimension_semantics = [#tpu.dimension_semantics<parallel>, #tpu.dimension_semantics<arbitrary>], iteration_bounds = array<i64: 1, 1>, scalar_prefetch = 0 : i64, scratch_operands = 0 : i64, tpu.core_type = #tpu.core_type<tc>, window_params = [{transform_indices = @transform_0, window_bounds = array<i64: 4096, 128>}, {transform_indices = @transform_1, window_bounds = array<i64: 32, 128>}]} {
    %c0_i32 = arith.constant 0 : i32
    %0 = arith.cmpi eq, %arg1, %c0_i32 : i32
    %1 = arith.extui %0 : i1 to i32
    %c0_i32_0 = arith.constant 0 : i32
    %2 = arith.cmpi ne, %1, %c0_i32_0 : i32
    scf.if %2 {
      %cst = arith.constant 0.000000e+00 : f32
      %15 = vector.broadcast %cst : f32 to vector<32x128xf32>
      %c0 = arith.constant 0 : index
      %c0_6 = arith.constant 0 : index
      %16 = vector.load %arg3[%c0, %c0_6] : memref<32x128xf32, #tpu.memory_space<vmem>>, vector<32x128xf32>
      tpu.vector_store %arg3[%c0, %c0_6], %15 {strides = array<i32>} : memref<32x128xf32, #tpu.memory_space<vmem>>, vector<32x128xf32>,
    } else {
    }
    %c1_i32 = arith.constant 1 : i32
    %3 = arith.muli %arg0, %c1_i32 : i32
    %4 = arith.addi %3, %arg1 : i32
    %c4096_i32 = arith.constant 4096 : i32
    %5 = arith.muli %4, %c4096_i32 : i32
    %c4096_i32_1 = arith.constant 4096 : i32
    %6 = arith.addi %5, %c4096_i32_1 : i32
    %c4096_i32_2 = arith.constant 4096 : i32
    %7 = arith.cmpi sle, %6, %c4096_i32_2 : i32
    %8 = arith.extui %7 : i1 to i32
    %c0_i32_3 = arith.constant 0 : i32
    %9 = arith.cmpi ne, %8, %c0_i32_3 : i32
    scf.if %9 {
      %cst = arith.constant 0.000000e+00 : f32
      %15 = vector.broadcast %cst : f32 to vector<32x128xf32>
      %c0 = arith.constant 0 : index
      %c0_6 = arith.constant 0 : index
      %16 = vector.load %arg2[%c0, %c0_6] : memref<4096x128xf32, #tpu.memory_space<vmem>>, vector<4096x128xf32>
      %17 = vector.shape_cast %16 : vector<4096x128xf32> to vector<128x32x128xf32>
      %cst_7 = arith.constant dense<0.000000e+00> : vector<32x128xf32>
      %18 = vector.multi_reduction <add>, %17, %cst_7 [0] : vector<128x32x128xf32> to vector<32x128xf32>
      %19 = arith.addf %15, %18 : vector<32x128xf32>
      %c0_8 = arith.constant 0 : index
      %c0_9 = arith.constant 0 : index
      %20 = vector.load %arg3[%c0_8, %c0_9] : memref<32x128xf32, #tpu.memory_space<vmem>>, vector<32x128xf32>
      %21 = arith.addf %20, %19 : vector<32x128xf32>
      %c0_10 = arith.constant 0 : index
      %c0_11 = arith.constant 0 : index
      %22 = vector.load %arg3[%c0_10, %c0_11] : memref<32x128xf32, #tpu.memory_space<vmem>>, vector<32x128xf32>
      tpu.vector_store %arg3[%c0_10, %c0_11], %21 {strides = array<i32>} : memref<32x128xf32, #tpu.memory_space<vmem>>, vector<32x128xf32>,
    } else {
    }
    %true = arith.constant true
    %10 = arith.xori %7, %true : i1
    %c4096_i32_4 = arith.constant 4096 : i32
    %11 = arith.cmpi slt, %5, %c4096_i32_4 : i32
    %12 = arith.andi %10, %11 : i1
    %13 = arith.extui %12 : i1 to i32
    %c0_i32_5 = arith.constant 0 : i32
    %14 = arith.cmpi ne, %13, %c0_i32_5 : i32
    scf.if %14 {
      %c0_i32_6 = arith.constant 0 : i32
      %c128_i32 = arith.constant 128 : i32
      %15 = arith.addi %c0_i32_6, %c128_i32 : i32
      %c1_i32_7 = arith.constant 1 : i32
      scf.for %arg4 = %c0_i32_6 to %15 step %c1_i32_7  : i32 {
        %c32_i32 = arith.constant 32 : i32
        %16 = arith.muli %arg4, %c32_i32 : i32
        %17 = tpu.assume_multiple %16, 32 : i32
        %18 = arith.addi %5, %17 : i32
        %c32_i32_9 = arith.constant 32 : i32
        %19 = arith.addi %18, %c32_i32_9 : i32
        %c4096_i32_10 = arith.constant 4096 : i32
        %20 = arith.cmpi sle, %19, %c4096_i32_10 : i32
        %21 = arith.extui %20 : i1 to i32
        %c0_i32_11 = arith.constant 0 : i32
        %22 = arith.cmpi ne, %21, %c0_i32_11 : i32
        scf.if %22 {
          %c0 = arith.constant 0 : index
          %c0_16 = arith.constant 0 : index
          %29 = vector.load %arg3[%c0, %c0_16] : memref<32x128xf32, #tpu.memory_space<vmem>>, vector<32x128xf32>
          %30 = arith.index_cast %17 : i32 to index
          %c0_17 = arith.constant 0 : index
          %31 = vector.load %arg2[%30, %c0_17] : memref<4096x128xf32, #tpu.memory_space<vmem>>, vector<32x128xf32>
          %32 = arith.addf %29, %31 : vector<32x128xf32>
          %c0_18 = arith.constant 0 : index
          %c0_19 = arith.constant 0 : index
          %33 = vector.load %arg3[%c0_18, %c0_19] : memref<32x128xf32, #tpu.memory_space<vmem>>, vector<32x128xf32>
          tpu.vector_store %arg3[%c0_18, %c0_19], %32 {strides = array<i32>} : memref<32x128xf32, #tpu.memory_space<vmem>>, vector<32x128xf32>,
        } else {
        }
        %c4096_i32_12 = arith.constant 4096 : i32
        %23 = arith.cmpi slt, %18, %c4096_i32_12 : i32
        %c32_i32_13 = arith.constant 32 : i32
        %24 = arith.addi %18, %c32_i32_13 : i32
        %c4096_i32_14 = arith.constant 4096 : i32
        %25 = arith.cmpi sgt, %24, %c4096_i32_14 : i32
        %26 = arith.andi %23, %25 : i1
        %27 = arith.extui %26 : i1 to i32
        %c0_i32_15 = arith.constant 0 : i32
        %28 = arith.cmpi ne, %27, %c0_i32_15 : i32
        scf.if %28 {
          %29 = tpu.iota {dimensions = array<i32: 0>} : vector<32x128xi32>
          %30 = vector.broadcast %18 : i32 to vector<32x128xi32>
          %31 = arith.addi %29, %30 : vector<32x128xi32>
          %32 = arith.index_cast %17 : i32 to index
          %c0 = arith.constant 0 : index
          %33 = vector.load %arg2[%32, %c0] : memref<4096x128xf32, #tpu.memory_space<vmem>>, vector<32x128xf32>
          %c0_16 = arith.constant 0 : index
          %c0_17 = arith.constant 0 : index
          %34 = vector.load %arg3[%c0_16, %c0_17] : memref<32x128xf32, #tpu.memory_space<vmem>>, vector<32x128xf32>
          %c4096_i32_18 = arith.constant 4096 : i32
          %35 = vector.broadcast %c4096_i32_18 : i32 to vector<32x128xi32>
          %36 = arith.cmpi slt, %31, %35 : vector<32x128xi32>
          %cst = arith.constant 0.000000e+00 : f32
          %37 = vector.broadcast %cst : f32 to vector<32x128xf32>
          %38 = arith.select %36, %33, %37 : vector<32x128xi1>, vector<32x128xf32>
          %39 = arith.addf %34, %38 : vector<32x128xf32>
          %c0_19 = arith.constant 0 : index
          %c0_20 = arith.constant 0 : index
          %40 = vector.load %arg3[%c0_19, %c0_20] : memref<32x128xf32, #tpu.memory_space<vmem>>, vector<32x128xf32>
          tpu.vector_store %arg3[%c0_19, %c0_20], %39 {strides = array<i32>} : memref<32x128xf32, #tpu.memory_space<vmem>>, vector<32x128xf32>,
        } else {
        }
      }
      %c128_i32_8 = arith.constant 128 : i32
    } else {
    }
    return
  }
  func.func @transform_0(%arg0: i32, %arg1: i32) -> (i32, i32) {
    %c1_i32 = arith.constant 1 : i32
    %0 = arith.muli %arg0, %c1_i32 : i32
    %1 = arith.addi %0, %arg1 : i32
    %c0_i32 = arith.constant 0 : i32
    %2 = arith.minsi %1, %c0_i32 : i32
    %c0_i32_0 = arith.constant 0 : i32
    %c0_i32_1 = arith.constant 0 : i32
    return %2, %c0_i32_0 : i32, i32
  }
  func.func @transform_1(%arg0: i32, %arg1: i32) -> (i32, i32) {
    %c0_i32 = arith.constant 0 : i32
    %c0_i32_0 = arith.constant 0 : i32
    return %arg0, %c0_i32 : i32, i32
  }
}

</mosaic_0001>

<llo_original>
// kernel: tpu_custom_call.1
$region0: #{tpu_custom_call.1}
  #allocation0 [shape = 'u32[]', space=smem, size = 0x4, offset = 0x4, fixed_abs, tag = 'smem constant byte address 0x4 - core index']
  #allocation1 [shape = 'u32[144,128]{1,0:T(1,128)}', space=vmem, size = 0x12000, scoped, tag = 'internal scratch']
  %s0 = inlined_call_operand.hbm [shape: f32[4096,128], index: 0, kind: input, shape index: {}]
  %s1 = inlined_call_operand.hbm [shape: f32[32,128], index: 1, kind: output, shape index: {}]
  %s2 = sld [smem:[#allocation0]]
  $region45: #{tpu_custom_call.1} parent=0
    _
  %s4 = ssub.s32 1, %s2
  %s5 = scalar_select 0, %s4, %s2
  $region1: #{tpu_custom_call.1} parent=0
    #allocation2 [shape = 'u8[2097152]{0}', space=vmem, size = 0x200000, scoped, tag = 'input window, operand 0, single buffered']
    #allocation3 [shape = 's32[1]{0}', space=sflag, size = 0x4, scoped, tag = 'scoped memory for tpu_custom_call.1']
    #allocation4 [shape = 's32[1]{0}', space=sflag, size = 0x4, scoped, tag = 'scoped memory for tpu_custom_call.1']
    #allocation5 [shape = 'u8[16384]{0}', space=vmem, size = 0x4000, scoped, tag = 'output window, operand 0, single buffered']
    %6 = vsyncpa [#allocation3], 0
    %7 = vsyncpa [#allocation4], 0
    // Predicated region
    $region2: #{tpu_custom_call.1} parent=1 // pred_check
      _
    $region3: #{tpu_custom_call.1} parent=1 // pred_check_branch
      %9 = sbr.rel (0) target = $region5
    $region4: #{tpu_custom_call.1} parent=1 // pred_region
      %s10 = sadd.s32 0, 0
      %p11 = scmp.lt.s32.totalorder %s10, 0
      %s12 = scalar_select %p11, %s10, 0
      %s13 = smul.u32 512, %s12
      %s15 = ssub.s32 65536, 65536
      %16 = vsyncadd [#allocation3], %s15
      %s17 = smul.addr %s13, 128
      %s18 = scalar_lea.hbm %s0, %s17
      %s19 = sshll.u32 [#allocation2], 4
      %s20 = int_to_ptr.vmem [resolvable:$true] %s19
      %25 = dma.hbm_to_vmem [thread:$0]  %s18, 65536, %s20, [#allocation3], 128, 128, 8
    $region5: #{tpu_custom_call.1} parent=1 // pred_fallthru
      _
    // Predicated region
    $region6: #{tpu_custom_call.1} parent=1 // pred_check
      _
    $region7: #{tpu_custom_call.1} parent=1 // pred_check_branch
      %27 = sbr.rel (0) target = $region9
    $region8: #{tpu_custom_call.1} parent=1 // pred_region
      %28 = dma.done [#allocation3], 65536
    $region9: #{tpu_custom_call.1} parent=1 // pred_fallthru
      _
    %s29 = sadd.s32 0, 0
    %p30 = scmp.lt.s32.totalorder %s29, 0
    %s31 = scalar_select %p30, %s29, 0
    %s32 = smul.u32 512, %s31
    %p33 = scmp.eq.s32.totalorder 0, 0
    // Predicated region
    $region10: #{tpu_custom_call.1} parent=1 // pred_check
      %p34 = pneg %p33
    $region11: #{tpu_custom_call.1} parent=1 // pred_check_branch
      %36 = sbr.rel (%p34) target = $region13
    $region12: #{tpu_custom_call.1} parent=1 // pred_region
      %37 = vst [vmem:[#allocation5] sm:$0xff] 0.0
      %38 = vst [vmem:[#allocation5 + $0x8] sm:$0xff] 0.0
      %39 = vst [vmem:[#allocation5 + $0x10] sm:$0xff] 0.0
      %40 = vst [vmem:[#allocation5 + $0x18] sm:$0xff] 0.0
    $region13: #{tpu_custom_call.1} parent=1 // pred_fallthru
      _
    %s41 = sadd.s32 0, 0
    %s42 = smul.u32 %s41, 4096
    %s43 = sadd.s32 %s42, 4096
    %p44 = scmp.le.s32.totalorder %s43, 4096
    // Predicated region
    $region14: #{tpu_custom_call.1} parent=1 // pred_check
      %p45 = pneg %p44
    $region15: #{tpu_custom_call.1} parent=1 // pred_check_branch
      %47 = sbr.rel (%p45) target = $region17
    $region16: #{tpu_custom_call.1} parent=1 // pred_region
      %v48 = vld [vmem:[#allocation2] sm:$0xff]
      %v49 = vld [vmem:[#allocation2 + $0x8] sm:$0xff]
      %v50 = vld [vmem:[#allocation2 + $0x10] sm:$0xff]
      %v51 = vld [vmem:[#allocation2 + $0x18] sm:$0xff]
      %v52 = vld [vmem:[#allocation2 + $0x20] sm:$0xff]
      %v53 = vld [vmem:[#allocation2 + $0x28] sm:$0xff]
      %v54 = vld [vmem:[#allocation2 + $0x30] sm:$0xff]
      %v55 = vld [vmem:[#allocation2 + $0x38] sm:$0xff]
      %v56 = vld [vmem:[#allocation2 + $0x40] sm:$0xff]
      %v57 = vld [vmem:[#allocation2 + $0x48] sm:$0xff]
      %v58 = vld [vmem:[#allocation2 + $0x50] sm:$0xff]
      %v59 = vld [vmem:[#allocation2 + $0x58] sm:$0xff]
      %v60 = vld [vmem:[#allocation2 + $0x60] sm:$0xff]
      %v61 = vld [vmem:[#allocation2 + $0x68] sm:$0xff]
      %v62 = vld [vmem:[#allocation2 + $0x70] sm:$0xff]
      %v63 = vld [vmem:[#allocation2 + $0x78] sm:$0xff]
      %v64 = vld [vmem:[#allocation2 + $0x80] sm:$0xff]
      %v65 = vld [vmem:[#allocation2 + $0x88] sm:$0xff]
      %v66 = vld [vmem:[#allocation2 + $0x90] sm:$0xff]
      %v67 = vld [vmem:[#allocation2 + $0x98] sm:$0xff]
      %v68 = vld [vmem:[#allocation2 + $0xa0] sm:$0xff]
      %v69 = vld [vmem:[#allocation2 + $0xa8] sm:$0xff]
      %v70 = vld [vmem:[#allocation2 + $0xb0] sm:$0xff]
      %v71 = vld [vmem:[#allocation2 + $0xb8] sm:$0xff]
      %v72 = vld [vmem:[#allocation2 + $0xc0] sm:$0xff]
      %v73 = vld [vmem:[#allocation2 + $0xc8] sm:$0xff]
      %v74 = vld [vmem:[#allocation2 + $0xd0] sm:$0xff]
      %v75 = vld [vmem:[#allocation2 + $0xd8] sm:$0xff]
      %v76 = vld [vmem:[#allocation2 + $0xe0] sm:$0xff]
      %v77 = vld [vmem:[#allocation2 + $0xe8] sm:$0xff]
      %v78 = vld [vmem:[#allocation2 + $0xf0] sm:$0xff]
      %v79 = vld [vmem:[#allocation2 + $0xf8] sm:$0xff]
      %v80 = vld [vmem:[#allocation2 + $0x100] sm:$0xff]
      %v81 = vld [vmem:[#allocation2 + $0x108] sm:$0xff]
      %v82 = vld [vmem:[#allocation2 + $0x110] sm:$0xff]
      %v83 = vld [vmem:[#allocation2 + $0x118] sm:$0xff]
      %v84 = vld [vmem:[#allocation2 + $0x120] sm:$0xff]
      %v85 = vld [vmem:[#allocation2 + $0x128] sm:$0xff]
      %v86 = vld [vmem:[#allocation2 + $0x130] sm:$0xff]
      %v87 = vld [vmem:[#allocation2 + $0x138] sm:$0xff]
      %v88 = vld [vmem:[#allocation2 + $0x140] sm:$0xff]
      %v89 = vld [vmem:[#allocation2 + $0x148] sm:$0xff]
      %v90 = vld [vmem:[#allocation2 + $0x150] sm:$0xff]
      %v91 = vld [vmem:[#allocation2 + $0x158] sm:$0xff]
      %v92 = vld [vmem:[#allocation2 + $0x160] sm:$0xff]
      %v93 = vld [vmem:[#allocation2 + $0x168] sm:$0xff]
      %v94 = vld [vmem:[#allocation2 + $0x170] sm:$0xff]
      %v95 = vld [vmem:[#allocation2 + $0x178] sm:$0xff]
      %v96 = vld [vmem:[#allocation2 + $0x180] sm:$0xff]
      %v97 = vld [vmem:[#allocation2 + $0x188] sm:$0xff]
      %v98 = vld [vmem:[#allocation2 + $0x190] sm:$0xff]
      %v99 = vld [vmem:[#allocation2 + $0x198] sm:$0xff]
      %v100 = vld [vmem:[#allocation2 + $0x1a0] sm:$0xff]
      %v101 = vld [vmem:[#allocation2 + $0x1a8] sm:$0xff]
      %v102 = vld [vmem:[#allocation2 + $0x1b0] sm:$0xff]
      %v103 = vld [vmem:[#allocation2 + $0x1b8] sm:$0xff]
      %v104 = vld [vmem:[#allocation2 + $0x1c0] sm:$0xff]
      %v105 = vld [vmem:[#allocation2 + $0x1c8] sm:$0xff]
      %v106 = vld [vmem:[#allocation2 + $0x1d0] sm:$0xff]
      %v107 = vld [vmem:[#allocation2 + $0x1d8] sm:$0xff]
      %v108 = vld [vmem:[#allocation2 + $0x1e0] sm:$0xff]
      %v109 = vld [vmem:[#allocation2 + $0x1e8] sm:$0xff]
      %v110 = vld [vmem:[#allocation2 + $0x1f0] sm:$0xff]
      %v111 = vld [vmem:[#allocation2 + $0x1f8] sm:$0xff]
      %v112 = vld [vmem:[#allocation2 + $0x200] sm:$0xff]
      %v113 = vld [vmem:[#allocation2 + $0x208] sm:$0xff]
      %v114 = vld [vmem:[#allocation2 + $0x210] sm:$0xff]
      %v115 = vld [vmem:[#allocation2 + $0x218] sm:$0xff]
      %v116 = vld [vmem:[#allocation2 + $0x220] sm:$0xff]
      %v117 = vld [vmem:[#allocation2 + $0x228] sm:$0xff]
      %v118 = vld [vmem:[#allocation2 + $0x230] sm:$0xff]
      %v119 = vld [vmem:[#allocation2 + $0x238] sm:$0xff]
      %v120 = vld [vmem:[#allocation2 + $0x240] sm:$0xff]
      %v121 = vld [vmem:[#allocation2 + $0x248] sm:$0xff]
      %v122 = vld [vmem:[#allocation2 + $0x250] sm:$0xff]
      %v123 = vld [vmem:[#allocation2 + $0x258] sm:$0xff]
      %v124 = vld [vmem:[#allocation2 + $0x260] sm:$0xff]
      %v125 = vld [vmem:[#allocation2 + $0x268] sm:$0xff]
      %v126 = vld [vmem:[#allocation2 + $0x270] sm:$0xff]
      %v127 = vld [vmem:[#allocation2 + $0x278] sm:$0xff]
      %v128 = vld [vmem:[#allocation2 + $0x280] sm:$0xff]
      %v129 = vld [vmem:[#allocation2 + $0x288] sm:$0xff]
      %v130 = vld [vmem:[#allocation2 + $0x290] sm:$0xff]
      %v131 = vld [vmem:[#allocation2 + $0x298] sm:$0xff]
      %v132 = vld [vmem:[#allocation2 + $0x2a0] sm:$0xff]
      %v133 = vld [vmem:[#allocation2 + $0x2a8] sm:$0xff]
      %v134 = vld [vmem:[#allocation2 + $0x2b0] sm:$0xff]
      %v135 = vld [vmem:[#allocation2 + $0x2b8] sm:$0xff]
      %v136 = vld [vmem:[#allocation2 + $0x2c0] sm:$0xff]
      %v137 = vld [vmem:[#allocation2 + $0x2c8] sm:$0xff]
      %v138 = vld [vmem:[#allocation2 + $0x2d0] sm:$0xff]
      %v139 = vld [vmem:[#allocation2 + $0x2d8] sm:$0xff]
      %v140 = vld [vmem:[#allocation2 + $0x2e0] sm:$0xff]
      %v141 = vld [vmem:[#allocation2 + $0x2e8] sm:$0xff]
      %v142 = vld [vmem:[#allocation2 + $0x2f0] sm:$0xff]
      %v143 = vld [vmem:[#allocation2 + $0x2f8] sm:$0xff]
      %v144 = vld [vmem:[#allocation2 + $0x300] sm:$0xff]
      %v145 = vld [vmem:[#allocation2 + $0x308] sm:$0xff]
      %v146 = vld [vmem:[#allocation2 + $0x310] sm:$0xff]
      %v147 = vld [vmem:[#allocation2 + $0x318] sm:$0xff]
      %v148 = vld [vmem:[#allocation2 + $0x320] sm:$0xff]
      %v149 = vld [vmem:[#allocation2 + $0x328] sm:$0xff]
      %v150 = vld [vmem:[#allocation2 + $0x330] sm:$0xff]
      %v151 = vld [vmem:[#allocation2 + $0x338] sm:$0xff]
      %v152 = vld [vmem:[#allocation2 + $0x340] sm:$0xff]
      %v153 = vld [vmem:[#allocation2 + $0x348] sm:$0xff]
      %v154 = vld [vmem:[#allocation2 + $0x350] sm:$0xff]
      %v155 = vld [vmem:[#allocation2 + $0x358] sm:$0xff]
      %v156 = vld [vmem:[#allocation2 + $0x360] sm:$0xff]
      %v157 = vld [vmem:[#allocation2 + $0x368] sm:$0xff]
      %v158 = vld [vmem:[#allocation2 + $0x370] sm:$0xff]
      %v159 = vld [vmem:[#allocation2 + $0x378] sm:$0xff]
      %v160 = vld [vmem:[#allocation2 + $0x380] sm:$0xff]
      %v161 = vld [vmem:[#allocation2 + $0x388] sm:$0xff]
      %v162 = vld [vmem:[#allocation2 + $0x390] sm:$0xff]
      %v163 = vld [vmem:[#allocation2 + $0x398] sm:$0xff]
      %v164 = vld [vmem:[#allocation2 + $0x3a0] sm:$0xff]
      %v165 = vld [vmem:[#allocation2 + $0x3a8] sm:$0xff]
      %v166 = vld [vmem:[#allocation2 + $0x3b0] sm:$0xff]
      %v167 = vld [vmem:[#allocation2 + $0x3b8] sm:$0xff]
      %v168 = vld [vmem:[#allocation2 + $0x3c0] sm:$0xff]
      %v169 = vld [vmem:[#allocation2 + $0x3c8] sm:$0xff]
      %v170 = vld [vmem:[#allocation2 + $0x3d0] sm:$0xff]
      %v171 = vld [vmem:[#allocation2 + $0x3d8] sm:$0xff]
      %v172 = vld [vmem:[#allocation2 + $0x3e0] sm:$0xff]
      %v173 = vld [vmem:[#allocation2 + $0x3e8] sm:$0xff]
      %v174 = vld [vmem:[#allocation2 + $0x3f0] sm:$0xff]
      %v175 = vld [vmem:[#allocation2 + $0x3f8] sm:$0xff]
      %v176 = vld [vmem:[#allocation2 + $0x400] sm:$0xff]
      %v177 = vld [vmem:[#allocation2 + $0x408] sm:$0xff]
      %v178 = vld [vmem:[#allocation2 + $0x410] sm:$0xff]
      %v179 = vld [vmem:[#allocation2 + $0x418] sm:$0xff]
      %v180 = vld [vmem:[#allocation2 + $0x420] sm:$0xff]
      %v181 = vld [vmem:[#allocation2 + $0x428] sm:$0xff]
      %v182 = vld [vmem:[#allocation2 + $0x430] sm:$0xff]
      %v183 = vld [vmem:[#allocation2 + $0x438] sm:$0xff]
      %v184 = vld [vmem:[#allocation2 + $0x440] sm:$0xff]
      %v185 = vld [vmem:[#allocation2 + $0x448] sm:$0xff]
      %v186 = vld [vmem:[#allocation2 + $0x450] sm:$0xff]
      %v187 = vld [vmem:[#allocation2 + $0x458] sm:$0xff]
      %v188 = vld [vmem:[#allocation2 + $0x460] sm:$0xff]
      %v189 = vld [vmem:[#allocation2 + $0x468] sm:$0xff]
      %v190 = vld [vmem:[#allocation2 + $0x470] sm:$0xff]
      %v191 = vld [vmem:[#allocation2 + $0x478] sm:$0xff]
      %v192 = vld [vmem:[#allocation2 + $0x480] sm:$0xff]
      %v193 = vld [vmem:[#allocation2 + $0x488] sm:$0xff]
      %v194 = vld [vmem:[#allocation2 + $0x490] sm:$0xff]
      %v195 = vld [vmem:[#allocation2 + $0x498] sm:$0xff]
      %v196 = vld [vmem:[#allocation2 + $0x4a0] sm:$0xff]
      %v197 = vld [vmem:[#allocation2 + $0x4a8] sm:$0xff]
      %v198 = vld [vmem:[#allocation2 + $0x4b0] sm:$0xff]
      %v199 = vld [vmem:[#allocation2 + $0x4b8] sm:$0xff]
      %v200 = vld [vmem:[#allocation2 + $0x4c0] sm:$0xff]
      %v201 = vld [vmem:[#allocation2 + $0x4c8] sm:$0xff]
      %v202 = vld [vmem:[#allocation2 + $0x4d0] sm:$0xff]
      %v203 = vld [vmem:[#allocation2 + $0x4d8] sm:$0xff]
      %v204 = vld [vmem:[#allocation2 + $0x4e0] sm:$0xff]
      %v205 = vld [vmem:[#allocation2 + $0x4e8] sm:$0xff]
      %v206 = vld [vmem:[#allocation2 + $0x4f0] sm:$0xff]
      %v207 = vld [vmem:[#allocation2 + $0x4f8] sm:$0xff]
      %v208 = vld [vmem:[#allocation2 + $0x500] sm:$0xff]
      %v209 = vld [vmem:[#allocation2 + $0x508] sm:$0xff]
      %v210 = vld [vmem:[#allocation2 + $0x510] sm:$0xff]
      %v211 = vld [vmem:[#allocation2 + $0x518] sm:$0xff]
      %v212 = vld [vmem:[#allocation2 + $0x520] sm:$0xff]
      %v213 = vld [vmem:[#allocation2 + $0x528] sm:$0xff]
      %v214 = vld [vmem:[#allocation2 + $0x530] sm:$0xff]
      %v215 = vld [vmem:[#allocation2 + $0x538] sm:$0xff]
      %v216 = vld [vmem:[#allocation2 + $0x540] sm:$0xff]
      %v217 = vld [vmem:[#allocation2 + $0x548] sm:$0xff]
      %v218 = vld [vmem:[#allocation2 + $0x550] sm:$0xff]
      %v219 = vld [vmem:[#allocation2 + $0x558] sm:$0xff]
      %v220 = vld [vmem:[#allocation2 + $0x560] sm:$0xff]
      %v221 = vld [vmem:[#allocation2 + $0x568] sm:$0xff]
      %v222 = vld [vmem:[#allocation2 + $0x570] sm:$0xff]
      %v223 = vld [vmem:[#allocation2 + $0x578] sm:$0xff]
      %v224 = vld [vmem:[#allocation2 + $0x580] sm:$0xff]
      %v225 = vld [vmem:[#allocation2 + $0x588] sm:$0xff]
      %v226 = vld [vmem:[#allocation2 + $0x590] sm:$0xff]
      %v227 = vld [vmem:[#allocation2 + $0x598] sm:$0xff]
      %v228 = vld [vmem:[#allocation2 + $0x5a0] sm:$0xff]
      %v229 = vld [vmem:[#allocation2 + $0x5a8] sm:$0xff]
      %v230 = vld [vmem:[#allocation2 + $0x5b0] sm:$0xff]
      %v231 = vld [vmem:[#allocation2 + $0x5b8] sm:$0xff]
      %v232 = vld [vmem:[#allocation2 + $0x5c0] sm:$0xff]
      %v233 = vld [vmem:[#allocation2 + $0x5c8] sm:$0xff]
      %v234 = vld [vmem:[#allocation2 + $0x5d0] sm:$0xff]
      %v235 = vld [vmem:[#allocation2 + $0x5d8] sm:$0xff]
      %v236 = vld [vmem:[#allocation2 + $0x5e0] sm:$0xff]
      %v237 = vld [vmem:[#allocation2 + $0x5e8] sm:$0xff]
      %v238 = vld [vmem:[#allocation2 + $0x5f0] sm:$0xff]
      %v239 = vld [vmem:[#allocation2 + $0x5f8] sm:$0xff]
      %v240 = vld [vmem:[#allocation2 + $0x600] sm:$0xff]
      %v241 = vld [vmem:[#allocation2 + $0x608] sm:$0xff]
      %v242 = vld [vmem:[#allocation2 + $0x610] sm:$0xff]
      %v243 = vld [vmem:[#allocation2 + $0x618] sm:$0xff]
      %v244 = vld [vmem:[#allocation2 + $0x620] sm:$0xff]
      %v245 = vld [vmem:[#allocation2 + $0x628] sm:$0xff]
      %v246 = vld [vmem:[#allocation2 + $0x630] sm:$0xff]
      %v247 = vld [vmem:[#allocation2 + $0x638] sm:$0xff]
      %v248 = vld [vmem:[#allocation2 + $0x640] sm:$0xff]
      %v249 = vld [vmem:[#allocation2 + $0x648] sm:$0xff]
      %v250 = vld [vmem:[#allocation2 + $0x650] sm:$0xff]
      %v251 = vld [vmem:[#allocation2 + $0x658] sm:$0xff]
      %v252 = vld [vmem:[#allocation2 + $0x660] sm:$0xff]
      %v253 = vld [vmem:[#allocation2 + $0x668] sm:$0xff]
      %v254 = vld [vmem:[#allocation2 + $0x670] sm:$0xff]
      %v255 = vld [vmem:[#allocation2 + $0x678] sm:$0xff]
      %v256 = vld [vmem:[#allocation2 + $0x680] sm:$0xff]
      %v257 = vld [vmem:[#allocation2 + $0x688] sm:$0xff]
      %v258 = vld [vmem:[#allocation2 + $0x690] sm:$0xff]
      %v259 = vld [vmem:[#allocation2 + $0x698] sm:$0xff]
      %v260 = vld [vmem:[#allocation2 + $0x6a0] sm:$0xff]
      %v261 = vld [vmem:[#allocation2 + $0x6a8] sm:$0xff]
      %v262 = vld [vmem:[#allocation2 + $0x6b0] sm:$0xff]
      %v263 = vld [vmem:[#allocation2 + $0x6b8] sm:$0xff]
      %v264 = vld [vmem:[#allocation2 + $0x6c0] sm:$0xff]
      %v265 = vld [vmem:[#allocation2 + $0x6c8] sm:$0xff]
      %v266 = vld [vmem:[#allocation2 + $0x6d0] sm:$0xff]
      %v267 = vld [vmem:[#allocation2 + $0x6d8] sm:$0xff]
      %v268 = vld [vmem:[#allocation2 + $0x6e0] sm:$0xff]
      %v269 = vld [vmem:[#allocation2 + $0x6e8] sm:$0xff]
      %v270 = vld [vmem:[#allocation2 + $0x6f0] sm:$0xff]
      %v271 = vld [vmem:[#allocation2 + $0x6f8] sm:$0xff]
      %v272 = vld [vmem:[#allocation2 + $0x700] sm:$0xff]
      %v273 = vld [vmem:[#allocation2 + $0x708] sm:$0xff]
      %v274 = vld [vmem:[#allocation2 + $0x710] sm:$0xff]
      %v275 = vld [vmem:[#allocation2 + $0x718] sm:$0xff]
      %v276 = vld [vmem:[#allocation2 + $0x720] sm:$0xff]
      %v277 = vld [vmem:[#allocation2 + $0x728] sm:$0xff]
      %v278 = vld [vmem:[#allocation2 + $0x730] sm:$0xff]
      %v279 = vld [vmem:[#allocation2 + $0x738] sm:$0xff]
      %v280 = vld [vmem:[#allocation2 + $0x740] sm:$0xff]
      %v281 = vld [vmem:[#allocation2 + $0x748] sm:$0xff]
      %v282 = vld [vmem:[#allocation2 + $0x750] sm:$0xff]
      %v283 = vld [vmem:[#allocation2 + $0x758] sm:$0xff]
      %v284 = vld [vmem:[#allocation2 + $0x760] sm:$0xff]
      %v285 = vld [vmem:[#allocation2 + $0x768] sm:$0xff]
      %v286 = vld [vmem:[#allocation2 + $0x770] sm:$0xff]
      %v287 = vld [vmem:[#allocation2 + $0x778] sm:$0xff]
      %v288 = vld [vmem:[#allocation2 + $0x780] sm:$0xff]
      %v289 = vld [vmem:[#allocation2 + $0x788] sm:$0xff]
      %v290 = vld [vmem:[#allocation2 + $0x790] sm:$0xff]
      %v291 = vld [vmem:[#allocation2 + $0x798] sm:$0xff]
      %v292 = vld [vmem:[#allocation2 + $0x7a0] sm:$0xff]
      %v293 = vld [vmem:[#allocation2 + $0x7a8] sm:$0xff]
      %v294 = vld [vmem:[#allocation2 + $0x7b0] sm:$0xff]
      %v295 = vld [vmem:[#allocation2 + $0x7b8] sm:$0xff]
      %v296 = vld [vmem:[#allocation2 + $0x7c0] sm:$0xff]
      %v297 = vld [vmem:[#allocation2 + $0x7c8] sm:$0xff]
      %v298 = vld [vmem:[#allocation2 + $0x7d0] sm:$0xff]
      %v299 = vld [vmem:[#allocation2 + $0x7d8] sm:$0xff]
      %v300 = vld [vmem:[#allocation2 + $0x7e0] sm:$0xff]
      %v301 = vld [vmem:[#allocation2 + $0x7e8] sm:$0xff]
      %v302 = vld [vmem:[#allocation2 + $0x7f0] sm:$0xff]
      %v303 = vld [vmem:[#allocation2 + $0x7f8] sm:$0xff]
      %v304 = vld [vmem:[#allocation2 + $0x800] sm:$0xff]
      %v305 = vld [vmem:[#allocation2 + $0x808] sm:$0xff]
      %v306 = vld [vmem:[#allocation2 + $0x810] sm:$0xff]
      %v307 = vld [vmem:[#allocation2 + $0x818] sm:$0xff]
      %v308 = vld [vmem:[#allocation2 + $0x820] sm:$0xff]
      %v309 = vld [vmem:[#allocation2 + $0x828] sm:$0xff]
      %v310 = vld [vmem:[#allocation2 + $0x830] sm:$0xff]
      %v311 = vld [vmem:[#allocation2 + $0x838] sm:$0xff]
      %v312 = vld [vmem:[#allocation2 + $0x840] sm:$0xff]
      %v313 = vld [vmem:[#allocation2 + $0x848] sm:$0xff]
      %v314 = vld [vmem:[#allocation2 + $0x850] sm:$0xff]
      %v315 = vld [vmem:[#allocation2 + $0x858] sm:$0xff]
      %v316 = vld [vmem:[#allocation2 + $0x860] sm:$0xff]
      %v317 = vld [vmem:[#allocation2 + $0x868] sm:$0xff]
      %v318 = vld [vmem:[#allocation2 + $0x870] sm:$0xff]
      %v319 = vld [vmem:[#allocation2 + $0x878] sm:$0xff]
      %v320 = vld [vmem:[#allocation2 + $0x880] sm:$0xff]
      %v321 = vld [vmem:[#allocation2 + $0x888] sm:$0xff]
      %v322 = vld [vmem:[#allocation2 + $0x890] sm:$0xff]
      %v323 = vld [vmem:[#allocation2 + $0x898] sm:$0xff]
      %v324 = vld [vmem:[#allocation2 + $0x8a0] sm:$0xff]
      %v325 = vld [vmem:[#allocation2 + $0x8a8] sm:$0xff]
      %v326 = vld [vmem:[#allocation2 + $0x8b0] sm:$0xff]
      %v327 = vld [vmem:[#allocation2 + $0x8b8] sm:$0xff]
      %v328 = vld [vmem:[#allocation2 + $0x8c0] sm:$0xff]
      %v329 = vld [vmem:[#allocation2 + $0x8c8] sm:$0xff]
      %v330 = vld [vmem:[#allocation2 + $0x8d0] sm:$0xff]
      %v331 = vld [vmem:[#allocation2 + $0x8d8] sm:$0xff]
      %v332 = vld [vmem:[#allocation2 + $0x8e0] sm:$0xff]
      %v333 = vld [vmem:[#allocation2 + $0x8e8] sm:$0xff]
      %v334 = vld [vmem:[#allocation2 + $0x8f0] sm:$0xff]
      %v335 = vld [vmem:[#allocation2 + $0x8f8] sm:$0xff]
      %v336 = vld [vmem:[#allocation2 + $0x900] sm:$0xff]
      %v337 = vld [vmem:[#allocation2 + $0x908] sm:$0xff]
      %v338 = vld [vmem:[#allocation2 + $0x910] sm:$0xff]
      %v339 = vld [vmem:[#allocation2 + $0x918] sm:$0xff]
      %v340 = vld [vmem:[#allocation2 + $0x920] sm:$0xff]
      %v341 = vld [vmem:[#allocation2 + $0x928] sm:$0xff]
      %v342 = vld [vmem:[#allocation2 + $0x930] sm:$0xff]
      %v343 = vld [vmem:[#allocation2 + $0x938] sm:$0xff]
      %v344 = vld [vmem:[#allocation2 + $0x940] sm:$0xff]
      %v345 = vld [vmem:[#allocation2 + $0x948] sm:$0xff]
      %v346 = vld [vmem:[#allocation2 + $0x950] sm:$0xff]
      %v347 = vld [vmem:[#allocation2 + $0x958] sm:$0xff]
      %v348 = vld [vmem:[#allocation2 + $0x960] sm:$0xff]
      %v349 = vld [vmem:[#allocation2 + $0x968] sm:$0xff]
      %v350 = vld [vmem:[#allocation2 + $0x970] sm:$0xff]
      %v351 = vld [vmem:[#allocation2 + $0x978] sm:$0xff]
      %v352 = vld [vmem:[#allocation2 + $0x980] sm:$0xff]
      %v353 = vld [vmem:[#allocation2 + $0x988] sm:$0xff]
      %v354 = vld [vmem:[#allocation2 + $0x990] sm:$0xff]
      %v355 = vld [vmem:[#allocation2 + $0x998] sm:$0xff]
      %v356 = vld [vmem:[#allocation2 + $0x9a0] sm:$0xff]
      %v357 = vld [vmem:[#allocation2 + $0x9a8] sm:$0xff]
      %v358 = vld [vmem:[#allocation2 + $0x9b0] sm:$0xff]
      %v359 = vld [vmem:[#allocation2 + $0x9b8] sm:$0xff]
      %v360 = vld [vmem:[#allocation2 + $0x9c0] sm:$0xff]
      %v361 = vld [vmem:[#allocation2 + $0x9c8] sm:$0xff]
      %v362 = vld [vmem:[#allocation2 + $0x9d0] sm:$0xff]
      %v363 = vld [vmem:[#allocation2 + $0x9d8] sm:$0xff]
      %v364 = vld [vmem:[#allocation2 + $0x9e0] sm:$0xff]
      %v365 = vld [vmem:[#allocation2 + $0x9e8] sm:$0xff]
      %v366 = vld [vmem:[#allocation2 + $0x9f0] sm:$0xff]
      %v367 = vld [vmem:[#allocation2 + $0x9f8] sm:$0xff]
      %v368 = vld [vmem:[#allocation2 + $0xa00] sm:$0xff]
      %v369 = vld [vmem:[#allocation2 + $0xa08] sm:$0xff]
      %v370 = vld [vmem:[#allocation2 + $0xa10] sm:$0xff]
      %v371 = vld [vmem:[#allocation2 + $0xa18] sm:$0xff]
      %v372 = vld [vmem:[#allocation2 + $0xa20] sm:$0xff]
      %v373 = vld [vmem:[#allocation2 + $0xa28] sm:$0xff]
      %v374 = vld [vmem:[#allocation2 + $0xa30] sm:$0xff]
      %v375 = vld [vmem:[#allocation2 + $0xa38] sm:$0xff]
      %v376 = vld [vmem:[#allocation2 + $0xa40] sm:$0xff]
      %v377 = vld [vmem:[#allocation2 + $0xa48] sm:$0xff]
      %v378 = vld [vmem:[#allocation2 + $0xa50] sm:$0xff]
      %v379 = vld [vmem:[#allocation2 + $0xa58] sm:$0xff]
      %v380 = vld [vmem:[#allocation2 + $0xa60] sm:$0xff]
      %v381 = vld [vmem:[#allocation2 + $0xa68] sm:$0xff]
      %v382 = vld [vmem:[#allocation2 + $0xa70] sm:$0xff]
      %v383 = vld [vmem:[#allocation2 + $0xa78] sm:$0xff]
      %v384 = vld [vmem:[#allocation2 + $0xa80] sm:$0xff]
      %v385 = vld [vmem:[#allocation2 + $0xa88] sm:$0xff]
      %v386 = vld [vmem:[#allocation2 + $0xa90] sm:$0xff]
      %v387 = vld [vmem:[#allocation2 + $0xa98] sm:$0xff]
      %v388 = vld [vmem:[#allocation2 + $0xaa0] sm:$0xff]
      %v389 = vld [vmem:[#allocation2 + $0xaa8] sm:$0xff]
      %v390 = vld [vmem:[#allocation2 + $0xab0] sm:$0xff]
      %v391 = vld [vmem:[#allocation2 + $0xab8] sm:$0xff]
      %v392 = vld [vmem:[#allocation2 + $0xac0] sm:$0xff]
      %v393 = vld [vmem:[#allocation2 + $0xac8] sm:$0xff]
      %v394 = vld [vmem:[#allocation2 + $0xad0] sm:$0xff]
      %v395 = vld [vmem:[#allocation2 + $0xad8] sm:$0xff]
      %v396 = vld [vmem:[#allocation2 + $0xae0] sm:$0xff]
      %v397 = vld [vmem:[#allocation2 + $0xae8] sm:$0xff]
      %v398 = vld [vmem:[#allocation2 + $0xaf0] sm:$0xff]
      %v399 = vld [vmem:[#allocation2 + $0xaf8] sm:$0xff]
      %v400 = vld [vmem:[#allocation2 + $0xb00] sm:$0xff]
      %v401 = vld [vmem:[#allocation2 + $0xb08] sm:$0xff]
      %v402 = vld [vmem:[#allocation2 + $0xb10] sm:$0xff]
      %v403 = vld [vmem:[#allocation2 + $0xb18] sm:$0xff]
      %v404 = vld [vmem:[#allocation2 + $0xb20] sm:$0xff]
      %v405 = vld [vmem:[#allocation2 + $0xb28] sm:$0xff]
      %v406 = vld [vmem:[#allocation2 + $0xb30] sm:$0xff]
      %v407 = vld [vmem:[#allocation2 + $0xb38] sm:$0xff]
      %v408 = vld [vmem:[#allocation2 + $0xb40] sm:$0xff]
      %v409 = vld [vmem:[#allocation2 + $0xb48] sm:$0xff]
      %v410 = vld [vmem:[#allocation2 + $0xb50] sm:$0xff]
      %v411 = vld [vmem:[#allocation2 + $0xb58] sm:$0xff]
      %v412 = vld [vmem:[#allocation2 + $0xb60] sm:$0xff]
      %v413 = vld [vmem:[#allocation2 + $0xb68] sm:$0xff]
      %v414 = vld [vmem:[#allocation2 + $0xb70] sm:$0xff]
      %v415 = vld [vmem:[#allocation2 + $0xb78] sm:$0xff]
      %v416 = vld [vmem:[#allocation2 + $0xb80] sm:$0xff]
      %v417 = vld [vmem:[#allocation2 + $0xb88] sm:$0xff]
      %v418 = vld [vmem:[#allocation2 + $0xb90] sm:$0xff]
      %v419 = vld [vmem:[#allocation2 + $0xb98] sm:$0xff]
      %v420 = vld [vmem:[#allocation2 + $0xba0] sm:$0xff]
      %v421 = vld [vmem:[#allocation2 + $0xba8] sm:$0xff]
      %v422 = vld [vmem:[#allocation2 + $0xbb0] sm:$0xff]
      %v423 = vld [vmem:[#allocation2 + $0xbb8] sm:$0xff]
      %v424 = vld [vmem:[#allocation2 + $0xbc0] sm:$0xff]
      %v425 = vld [vmem:[#allocation2 + $0xbc8] sm:$0xff]
      %v426 = vld [vmem:[#allocation2 + $0xbd0] sm:$0xff]
      %v427 = vld [vmem:[#allocation2 + $0xbd8] sm:$0xff]
      %v428 = vld [vmem:[#allocation2 + $0xbe0] sm:$0xff]
      %v429 = vld [vmem:[#allocation2 + $0xbe8] sm:$0xff]
      %v430 = vld [vmem:[#allocation2 + $0xbf0] sm:$0xff]
      %v431 = vld [vmem:[#allocation2 + $0xbf8] sm:$0xff]
      %v432 = vld [vmem:[#allocation2 + $0xc00] sm:$0xff]
      %v433 = vld [vmem:[#allocation2 + $0xc08] sm:$0xff]
      %v434 = vld [vmem:[#allocation2 + $0xc10] sm:$0xff]
      %v435 = vld [vmem:[#allocation2 + $0xc18] sm:$0xff]
      %v436 = vld [vmem:[#allocation2 + $0xc20] sm:$0xff]
      %v437 = vld [vmem:[#allocation2 + $0xc28] sm:$0xff]
      %v438 = vld [vmem:[#allocation2 + $0xc30] sm:$0xff]
      %v439 = vld [vmem:[#allocation2 + $0xc38] sm:$0xff]
      %v440 = vld [vmem:[#allocation2 + $0xc40] sm:$0xff]
      %v441 = vld [vmem:[#allocation2 + $0xc48] sm:$0xff]
      %v442 = vld [vmem:[#allocation2 + $0xc50] sm:$0xff]
      %v443 = vld [vmem:[#allocation2 + $0xc58] sm:$0xff]
      %v444 = vld [vmem:[#allocation2 + $0xc60] sm:$0xff]
      %v445 = vld [vmem:[#allocation2 + $0xc68] sm:$0xff]
      %v446 = vld [vmem:[#allocation2 + $0xc70] sm:$0xff]
      %v447 = vld [vmem:[#allocation2 + $0xc78] sm:$0xff]
      %v448 = vld [vmem:[#allocation2 + $0xc80] sm:$0xff]
      %v449 = vld [vmem:[#allocation2 + $0xc88] sm:$0xff]
      %v450 = vld [vmem:[#allocation2 + $0xc90] sm:$0xff]
      %v451 = vld [vmem:[#allocation2 + $0xc98] sm:$0xff]
      %v452 = vld [vmem:[#allocation2 + $0xca0] sm:$0xff]
      %v453 = vld [vmem:[#allocation2 + $0xca8] sm:$0xff]
      %v454 = vld [vmem:[#allocation2 + $0xcb0] sm:$0xff]
      %v455 = vld [vmem:[#allocation2 + $0xcb8] sm:$0xff]
      %v456 = vld [vmem:[#allocation2 + $0xcc0] sm:$0xff]
      %v457 = vld [vmem:[#allocation2 + $0xcc8] sm:$0xff]
      %v458 = vld [vmem:[#allocation2 + $0xcd0] sm:$0xff]
      %v459 = vld [vmem:[#allocation2 + $0xcd8] sm:$0xff]
      %v460 = vld [vmem:[#allocation2 + $0xce0] sm:$0xff]
      %v461 = vld [vmem:[#allocation2 + $0xce8] sm:$0xff]
      %v462 = vld [vmem:[#allocation2 + $0xcf0] sm:$0xff]
      %v463 = vld [vmem:[#allocation2 + $0xcf8] sm:$0xff]
      %v464 = vld [vmem:[#allocation2 + $0xd00] sm:$0xff]
      %v465 = vld [vmem:[#allocation2 + $0xd08] sm:$0xff]
      %v466 = vld [vmem:[#allocation2 + $0xd10] sm:$0xff]
      %v467 = vld [vmem:[#allocation2 + $0xd18] sm:$0xff]
      %v468 = vld [vmem:[#allocation2 + $0xd20] sm:$0xff]
      %v469 = vld [vmem:[#allocation2 + $0xd28] sm:$0xff]
      %v470 = vld [vmem:[#allocation2 + $0xd30] sm:$0xff]
      %v471 = vld [vmem:[#allocation2 + $0xd38] sm:$0xff]
      %v472 = vld [vmem:[#allocation2 + $0xd40] sm:$0xff]
      %v473 = vld [vmem:[#allocation2 + $0xd48] sm:$0xff]
      %v474 = vld [vmem:[#allocation2 + $0xd50] sm:$0xff]
      %v475 = vld [vmem:[#allocation2 + $0xd58] sm:$0xff]
      %v476 = vld [vmem:[#allocation2 + $0xd60] sm:$0xff]
      %v477 = vld [vmem:[#allocation2 + $0xd68] sm:$0xff]
      %v478 = vld [vmem:[#allocation2 + $0xd70] sm:$0xff]
      %v479 = vld [vmem:[#allocation2 + $0xd78] sm:$0xff]
      %v480 = vld [vmem:[#allocation2 + $0xd80] sm:$0xff]
      %v481 = vld [vmem:[#allocation2 + $0xd88] sm:$0xff]
      %v482 = vld [vmem:[#allocation2 + $0xd90] sm:$0xff]
      %v483 = vld [vmem:[#allocation2 + $0xd98] sm:$0xff]
      %v484 = vld [vmem:[#allocation2 + $0xda0] sm:$0xff]
      %v485 = vld [vmem:[#allocation2 + $0xda8] sm:$0xff]
      %v486 = vld [vmem:[#allocation2 + $0xdb0] sm:$0xff]
      %v487 = vld [vmem:[#allocation2 + $0xdb8] sm:$0xff]
      %v488 = vld [vmem:[#allocation2 + $0xdc0] sm:$0xff]
      %v489 = vld [vmem:[#allocation2 + $0xdc8] sm:$0xff]
      %v490 = vld [vmem:[#allocation2 + $0xdd0] sm:$0xff]
      %v491 = vld [vmem:[#allocation2 + $0xdd8] sm:$0xff]
      %v492 = vld [vmem:[#allocation2 + $0xde0] sm:$0xff]
      %v493 = vld [vmem:[#allocation2 + $0xde8] sm:$0xff]
      %v494 = vld [vmem:[#allocation2 + $0xdf0] sm:$0xff]
      %v495 = vld [vmem:[#allocation2 + $0xdf8] sm:$0xff]
      %v496 = vld [vmem:[#allocation2 + $0xe00] sm:$0xff]
      %v497 = vld [vmem:[#allocation2 + $0xe08] sm:$0xff]
      %v498 = vld [vmem:[#allocation2 + $0xe10] sm:$0xff]
      %v499 = vld [vmem:[#allocation2 + $0xe18] sm:$0xff]
      %v500 = vld [vmem:[#allocation2 + $0xe20] sm:$0xff]
      %v501 = vld [vmem:[#allocation2 + $0xe28] sm:$0xff]
      %v502 = vld [vmem:[#allocation2 + $0xe30] sm:$0xff]
      %v503 = vld [vmem:[#allocation2 + $0xe38] sm:$0xff]
      %v504 = vld [vmem:[#allocation2 + $0xe40] sm:$0xff]
      %v505 = vld [vmem:[#allocation2 + $0xe48] sm:$0xff]
      %v506 = vld [vmem:[#allocation2 + $0xe50] sm:$0xff]
      %v507 = vld [vmem:[#allocation2 + $0xe58] sm:$0xff]
      %v508 = vld [vmem:[#allocation2 + $0xe60] sm:$0xff]
      %v509 = vld [vmem:[#allocation2 + $0xe68] sm:$0xff]
      %v510 = vld [vmem:[#allocation2 + $0xe70] sm:$0xff]
      %v511 = vld [vmem:[#allocation2 + $0xe78] sm:$0xff]
      %v512 = vld [vmem:[#allocation2 + $0xe80] sm:$0xff]
      %v513 = vld [vmem:[#allocation2 + $0xe88] sm:$0xff]
      %v514 = vld [vmem:[#allocation2 + $0xe90] sm:$0xff]
      %v515 = vld [vmem:[#allocation2 + $0xe98] sm:$0xff]
      %v516 = vld [vmem:[#allocation2 + $0xea0] sm:$0xff]
      %v517 = vld [vmem:[#allocation2 + $0xea8] sm:$0xff]
      %v518 = vld [vmem:[#allocation2 + $0xeb0] sm:$0xff]
      %v519 = vld [vmem:[#allocation2 + $0xeb8] sm:$0xff]
      %v520 = vld [vmem:[#allocation2 + $0xec0] sm:$0xff]
      %v521 = vld [vmem:[#allocation2 + $0xec8] sm:$0xff]
      %v522 = vld [vmem:[#allocation2 + $0xed0] sm:$0xff]
      %v523 = vld [vmem:[#allocation2 + $0xed8] sm:$0xff]
      %v524 = vld [vmem:[#allocation2 + $0xee0] sm:$0xff]
      %v525 = vld [vmem:[#allocation2 + $0xee8] sm:$0xff]
      %v526 = vld [vmem:[#allocation2 + $0xef0] sm:$0xff]
      %v527 = vld [vmem:[#allocation2 + $0xef8] sm:$0xff]
      %v528 = vld [vmem:[#allocation2 + $0xf00] sm:$0xff]
      %v529 = vld [vmem:[#allocation2 + $0xf08] sm:$0xff]
      %v530 = vld [vmem:[#allocation2 + $0xf10] sm:$0xff]
      %v531 = vld [vmem:[#allocation2 + $0xf18] sm:$0xff]
      %v532 = vld [vmem:[#allocation2 + $0xf20] sm:$0xff]
      %v533 = vld [vmem:[#allocation2 + $0xf28] sm:$0xff]
      %v534 = vld [vmem:[#allocation2 + $0xf30] sm:$0xff]
      %v535 = vld [vmem:[#allocation2 + $0xf38] sm:$0xff]
      %v536 = vld [vmem:[#allocation2 + $0xf40] sm:$0xff]
      %v537 = vld [vmem:[#allocation2 + $0xf48] sm:$0xff]
      %v538 = vld [vmem:[#allocation2 + $0xf50] sm:$0xff]
      %v539 = vld [vmem:[#allocation2 + $0xf58] sm:$0xff]
      %v540 = vld [vmem:[#allocation2 + $0xf60] sm:$0xff]
      %v541 = vld [vmem:[#allocation2 + $0xf68] sm:$0xff]
      %v542 = vld [vmem:[#allocation2 + $0xf70] sm:$0xff]
      %v543 = vld [vmem:[#allocation2 + $0xf78] sm:$0xff]
      %v544 = vld [vmem:[#allocation2 + $0xf80] sm:$0xff]
      %v545 = vld [vmem:[#allocation2 + $0xf88] sm:$0xff]
      %v546 = vld [vmem:[#allocation2 + $0xf90] sm:$0xff]
      %v547 = vld [vmem:[#allocation2 + $0xf98] sm:$0xff]
      %v548 = vld [vmem:[#allocation2 + $0xfa0] sm:$0xff]
      %v549 = vld [vmem:[#allocation2 + $0xfa8] sm:$0xff]
      %v550 = vld [vmem:[#allocation2 + $0xfb0] sm:$0xff]
      %v551 = vld [vmem:[#allocation2 + $0xfb8] sm:$0xff]
      %v552 = vld [vmem:[#allocation2 + $0xfc0] sm:$0xff]
      %v553 = vld [vmem:[#allocation2 + $0xfc8] sm:$0xff]
      %v554 = vld [vmem:[#allocation2 + $0xfd0] sm:$0xff]
      %v555 = vld [vmem:[#allocation2 + $0xfd8] sm:$0xff]
      %v556 = vld [vmem:[#allocation2 + $0xfe0] sm:$0xff]
      %v557 = vld [vmem:[#allocation2 + $0xfe8] sm:$0xff]
      %v558 = vld [vmem:[#allocation2 + $0xff0] sm:$0xff]
      %v559 = vld [vmem:[#allocation2 + $0xff8] sm:$0xff]
      %v560 = vadd.f32 %v48, %v52
      %v561 = vadd.f32 %v560, %v56
      %v562 = vadd.f32 %v561, %v60
      %v563 = vadd.f32 %v562, %v64
      %v564 = vadd.f32 %v563, %v68
      %v565 = vadd.f32 %v564, %v72
      %v566 = vadd.f32 %v565, %v76
      %v567 = vadd.f32 %v566, %v80
      %v568 = vadd.f32 %v567, %v84
      %v569 = vadd.f32 %v568, %v88
      %v570 = vadd.f32 %v569, %v92
      %v571 = vadd.f32 %v570, %v96
      %v572 = vadd.f32 %v571, %v100
      %v573 = vadd.f32 %v572, %v104
      %v574 = vadd.f32 %v573, %v108
      %v575 = vadd.f32 %v574, %v112
      %v576 = vadd.f32 %v575, %v116
      %v577 = vadd.f32 %v576, %v120
      %v578 = vadd.f32 %v577, %v124
      %v579 = vadd.f32 %v578, %v128
      %v580 = vadd.f32 %v579, %v132
      %v581 = vadd.f32 %v580, %v136
      %v582 = vadd.f32 %v581, %v140
      %v583 = vadd.f32 %v582, %v144
      %v584 = vadd.f32 %v583, %v148
      %v585 = vadd.f32 %v584, %v152
      %v586 = vadd.f32 %v585, %v156
      %v587 = vadd.f32 %v586, %v160
      %v588 = vadd.f32 %v587, %v164
      %v589 = vadd.f32 %v588, %v168
      %v590 = vadd.f32 %v589, %v172
      %v591 = vadd.f32 %v590, %v176
      %v592 = vadd.f32 %v591, %v180
      %v593 = vadd.f32 %v592, %v184
      %v594 = vadd.f32 %v593, %v188
      %v595 = vadd.f32 %v594, %v192
      %v596 = vadd.f32 %v595, %v196
      %v597 = vadd.f32 %v596, %v200
      %v598 = vadd.f32 %v597, %v204
      %v599 = vadd.f32 %v598, %v208
      %v600 = vadd.f32 %v599, %v212
      %v601 = vadd.f32 %v600, %v216
      %v602 = vadd.f32 %v601, %v220
      %v603 = vadd.f32 %v602, %v224
      %v604 = vadd.f32 %v603, %v228
      %v605 = vadd.f32 %v604, %v232
      %v606 = vadd.f32 %v605, %v236
      %v607 = vadd.f32 %v606, %v240
      %v608 = vadd.f32 %v607, %v244
      %v609 = vadd.f32 %v608, %v248
      %v610 = vadd.f32 %v609, %v252
      %v611 = vadd.f32 %v610, %v256
      %v612 = vadd.f32 %v611, %v260
      %v613 = vadd.f32 %v612, %v264
      %v614 = vadd.f32 %v613, %v268
      %v615 = vadd.f32 %v614, %v272
      %v616 = vadd.f32 %v615, %v276
      %v617 = vadd.f32 %v616, %v280
      %v618 = vadd.f32 %v617, %v284
      %v619 = vadd.f32 %v618, %v288
      %v620 = vadd.f32 %v619, %v292
      %v621 = vadd.f32 %v620, %v296
      %v622 = vadd.f32 %v621, %v300
      %v623 = vadd.f32 %v622, %v304
      %v624 = vadd.f32 %v623, %v308
      %v625 = vadd.f32 %v624, %v312
      %v626 = vadd.f32 %v625, %v316
      %v627 = vadd.f32 %v626, %v320
      %v628 = vadd.f32 %v627, %v324
      %v629 = vadd.f32 %v628, %v328
      %v630 = vadd.f32 %v629, %v332
      %v631 = vadd.f32 %v630, %v336
      %v632 = vadd.f32 %v631, %v340
      %v633 = vadd.f32 %v632, %v344
      %v634 = vadd.f32 %v633, %v348
      %v635 = vadd.f32 %v634, %v352
      %v636 = vadd.f32 %v635, %v356
      %v637 = vadd.f32 %v636, %v360
      %v638 = vadd.f32 %v637, %v364
      %v639 = vadd.f32 %v638, %v368
      %v640 = vadd.f32 %v639, %v372
      %v641 = vadd.f32 %v640, %v376
      %v642 = vadd.f32 %v641, %v380
      %v643 = vadd.f32 %v642, %v384
      %v644 = vadd.f32 %v643, %v388
      %v645 = vadd.f32 %v644, %v392
      %v646 = vadd.f32 %v645, %v396
      %v647 = vadd.f32 %v646, %v400
      %v648 = vadd.f32 %v647, %v404
      %v649 = vadd.f32 %v648, %v408
      %v650 = vadd.f32 %v649, %v412
      %v651 = vadd.f32 %v650, %v416
      %v652 = vadd.f32 %v651, %v420
      %v653 = vadd.f32 %v652, %v424
      %v654 = vadd.f32 %v653, %v428
      %v655 = vadd.f32 %v654, %v432
      %v656 = vadd.f32 %v655, %v436
      %v657 = vadd.f32 %v656, %v440
      %v658 = vadd.f32 %v657, %v444
      %v659 = vadd.f32 %v658, %v448
      %v660 = vadd.f32 %v659, %v452
      %v661 = vadd.f32 %v660, %v456
      %v662 = vadd.f32 %v661, %v460
      %v663 = vadd.f32 %v662, %v464
      %v664 = vadd.f32 %v663, %v468
      %v665 = vadd.f32 %v664, %v472
      %v666 = vadd.f32 %v665, %v476
      %v667 = vadd.f32 %v666, %v480
      %v668 = vadd.f32 %v667, %v484
      %v669 = vadd.f32 %v668, %v488
      %v670 = vadd.f32 %v669, %v492
      %v671 = vadd.f32 %v670, %v496
      %v672 = vadd.f32 %v671, %v500
      %v673 = vadd.f32 %v672, %v504
      %v674 = vadd.f32 %v673, %v508
      %v675 = vadd.f32 %v674, %v512
      %v676 = vadd.f32 %v675, %v516
      %v677 = vadd.f32 %v676, %v520
      %v678 = vadd.f32 %v677, %v524
      %v679 = vadd.f32 %v678, %v528
      %v680 = vadd.f32 %v679, %v532
      %v681 = vadd.f32 %v680, %v536
      %v682 = vadd.f32 %v681, %v540
      %v683 = vadd.f32 %v682, %v544
      %v684 = vadd.f32 %v683, %v548
      %v685 = vadd.f32 %v684, %v552
      %v686 = vadd.f32 %v685, %v556
      %v687 = vadd.f32 %v49, %v53
      %v688 = vadd.f32 %v687, %v57
      %v689 = vadd.f32 %v688, %v61
      %v690 = vadd.f32 %v689, %v65
      %v691 = vadd.f32 %v690, %v69
      %v692 = vadd.f32 %v691, %v73
      %v693 = vadd.f32 %v692, %v77
      %v694 = vadd.f32 %v693, %v81
      %v695 = vadd.f32 %v694, %v85
      %v696 = vadd.f32 %v695, %v89
      %v697 = vadd.f32 %v696, %v93
      %v698 = vadd.f32 %v697, %v97
      %v699 = vadd.f32 %v698, %v101
      %v700 = vadd.f32 %v699, %v105
      %v701 = vadd.f32 %v700, %v109
      %v702 = vadd.f32 %v701, %v113
      %v703 = vadd.f32 %v702, %v117
      %v704 = vadd.f32 %v703, %v121
      %v705 = vadd.f32 %v704, %v125
      %v706 = vadd.f32 %v705, %v129
      %v707 = vadd.f32 %v706, %v133
      %v708 = vadd.f32 %v707, %v137
      %v709 = vadd.f32 %v708, %v141
      %v710 = vadd.f32 %v709, %v145
      %v711 = vadd.f32 %v710, %v149
      %v712 = vadd.f32 %v711, %v153
      %v713 = vadd.f32 %v712, %v157
      %v714 = vadd.f32 %v713, %v161
      %v715 = vadd.f32 %v714, %v165
      %v716 = vadd.f32 %v715, %v169
      %v717 = vadd.f32 %v716, %v173
      %v718 = vadd.f32 %v717, %v177
      %v719 = vadd.f32 %v718, %v181
      %v720 = vadd.f32 %v719, %v185
      %v721 = vadd.f32 %v720, %v189
      %v722 = vadd.f32 %v721, %v193
      %v723 = vadd.f32 %v722, %v197
      %v724 = vadd.f32 %v723, %v201
      %v725 = vadd.f32 %v724, %v205
      %v726 = vadd.f32 %v725, %v209
      %v727 = vadd.f32 %v726, %v213
      %v728 = vadd.f32 %v727, %v217
      %v729 = vadd.f32 %v728, %v221
      %v730 = vadd.f32 %v729, %v225
      %v731 = vadd.f32 %v730, %v229
      %v732 = vadd.f32 %v731, %v233
      %v733 = vadd.f32 %v732, %v237
      %v734 = vadd.f32 %v733, %v241
      %v735 = vadd.f32 %v734, %v245
      %v736 = vadd.f32 %v735, %v249
      %v737 = vadd.f32 %v736, %v253
      %v738 = vadd.f32 %v737, %v257
      %v739 = vadd.f32 %v738, %v261
      %v740 = vadd.f32 %v739, %v265
      %v741 = vadd.f32 %v740, %v269
      %v742 = vadd.f32 %v741, %v273
      %v743 = vadd.f32 %v742, %v277
      %v744 = vadd.f32 %v743, %v281
      %v745 = vadd.f32 %v744, %v285
      %v746 = vadd.f32 %v745, %v289
      %v747 = vadd.f32 %v746, %v293
      %v748 = vadd.f32 %v747, %v297
      %v749 = vadd.f32 %v748, %v301
      %v750 = vadd.f32 %v749, %v305
      %v751 = vadd.f32 %v750, %v309
      %v752 = vadd.f32 %v751, %v313
      %v753 = vadd.f32 %v752, %v317
      %v754 = vadd.f32 %v753, %v321
      %v755 = vadd.f32 %v754, %v325
      %v756 = vadd.f32 %v755, %v329
      %v757 = vadd.f32 %v756, %v333
      %v758 = vadd.f32 %v757, %v337
      %v759 = vadd.f32 %v758, %v341
      %v760 = vadd.f32 %v759, %v345
      %v761 = vadd.f32 %v760, %v349
      %v762 = vadd.f32 %v761, %v353
      %v763 = vadd.f32 %v762, %v357
      %v764 = vadd.f32 %v763, %v361
      %v765 = vadd.f32 %v764, %v365
      %v766 = vadd.f32 %v765, %v369
      %v767 = vadd.f32 %v766, %v373
      %v768 = vadd.f32 %v767, %v377
      %v769 = vadd.f32 %v768, %v381
      %v770 = vadd.f32 %v769, %v385
      %v771 = vadd.f32 %v770, %v389
      %v772 = vadd.f32 %v771, %v393
      %v773 = vadd.f32 %v772, %v397
      %v774 = vadd.f32 %v773, %v401
      %v775 = vadd.f32 %v774, %v405
      %v776 = vadd.f32 %v775, %v409
      %v777 = vadd.f32 %v776, %v413
      %v778 = vadd.f32 %v777, %v417
      %v779 = vadd.f32 %v778, %v421
      %v780 = vadd.f32 %v779, %v425
      %v781 = vadd.f32 %v780, %v429
      %v782 = vadd.f32 %v781, %v433
      %v783 = vadd.f32 %v782, %v437
      %v784 = vadd.f32 %v783, %v441
      %v785 = vadd.f32 %v784, %v445
      %v786 = vadd.f32 %v785, %v449
      %v787 = vadd.f32 %v786, %v453
      %v788 = vadd.f32 %v787, %v457
      %v789 = vadd.f32 %v788, %v461
      %v790 = vadd.f32 %v789, %v465
      %v791 = vadd.f32 %v790, %v469
      %v792 = vadd.f32 %v791, %v473
      %v793 = vadd.f32 %v792, %v477
      %v794 = vadd.f32 %v793, %v481
      %v795 = vadd.f32 %v794, %v485
      %v796 = vadd.f32 %v795, %v489
      %v797 = vadd.f32 %v796, %v493
      %v798 = vadd.f32 %v797, %v497
      %v799 = vadd.f32 %v798, %v501
      %v800 = vadd.f32 %v799, %v505
      %v801 = vadd.f32 %v800, %v509
      %v802 = vadd.f32 %v801, %v513
      %v803 = vadd.f32 %v802, %v517
      %v804 = vadd.f32 %v803, %v521
      %v805 = vadd.f32 %v804, %v525
      %v806 = vadd.f32 %v805, %v529
      %v807 = vadd.f32 %v806, %v533
      %v808 = vadd.f32 %v807, %v537
      %v809 = vadd.f32 %v808, %v541
      %v810 = vadd.f32 %v809, %v545
      %v811 = vadd.f32 %v810, %v549
      %v812 = vadd.f32 %v811, %v553
      %v813 = vadd.f32 %v812, %v557
      %v814 = vadd.f32 %v50, %v54
      %v815 = vadd.f32 %v814, %v58
      %v816 = vadd.f32 %v815, %v62
      %v817 = vadd.f32 %v816, %v66
      %v818 = vadd.f32 %v817, %v70
      %v819 = vadd.f32 %v818, %v74
      %v820 = vadd.f32 %v819, %v78
      %v821 = vadd.f32 %v820, %v82
      %v822 = vadd.f32 %v821, %v86
      %v823 = vadd.f32 %v822, %v90
      %v824 = vadd.f32 %v823, %v94
      %v825 = vadd.f32 %v824, %v98
      %v826 = vadd.f32 %v825, %v102
      %v827 = vadd.f32 %v826, %v106
      %v828 = vadd.f32 %v827, %v110
      %v829 = vadd.f32 %v828, %v114
      %v830 = vadd.f32 %v829, %v118
      %v831 = vadd.f32 %v830, %v122
      %v832 = vadd.f32 %v831, %v126
      %v833 = vadd.f32 %v832, %v130
      %v834 = vadd.f32 %v833, %v134
      %v835 = vadd.f32 %v834, %v138
      %v836 = vadd.f32 %v835, %v142
      %v837 = vadd.f32 %v836, %v146
      %v838 = vadd.f32 %v837, %v150
      %v839 = vadd.f32 %v838, %v154
      %v840 = vadd.f32 %v839, %v158
      %v841 = vadd.f32 %v840, %v162
      %v842 = vadd.f32 %v841, %v166
      %v843 = vadd.f32 %v842, %v170
      %v844 = vadd.f32 %v843, %v174
      %v845 = vadd.f32 %v844, %v178
      %v846 = vadd.f32 %v845, %v182
      %v847 = vadd.f32 %v846, %v186
      %v848 = vadd.f32 %v847, %v190
      %v849 = vadd.f32 %v848, %v194
      %v850 = vadd.f32 %v849, %v198
      %v851 = vadd.f32 %v850, %v202
      %v852 = vadd.f32 %v851, %v206
      %v853 = vadd.f32 %v852, %v210
      %v854 = vadd.f32 %v853, %v214
      %v855 = vadd.f32 %v854, %v218
      %v856 = vadd.f32 %v855, %v222
      %v857 = vadd.f32 %v856, %v226
      %v858 = vadd.f32 %v857, %v230
      %v859 = vadd.f32 %v858, %v234
      %v860 = vadd.f32 %v859, %v238
      %v861 = vadd.f32 %v860, %v242
      %v862 = vadd.f32 %v861, %v246
      %v863 = vadd.f32 %v862, %v250
      %v864 = vadd.f32 %v863, %v254
      %v865 = vadd.f32 %v864, %v258
      %v866 = vadd.f32 %v865, %v262
      %v867 = vadd.f32 %v866, %v266
      %v868 = vadd.f32 %v867, %v270
      %v869 = vadd.f32 %v868, %v274
      %v870 = vadd.f32 %v869, %v278
      %v871 = vadd.f32 %v870, %v282
      %v872 = vadd.f32 %v871, %v286
      %v873 = vadd.f32 %v872, %v290
      %v874 = vadd.f32 %v873, %v294
      %v875 = vadd.f32 %v874, %v298
      %v876 = vadd.f32 %v875, %v302
      %v877 = vadd.f32 %v876, %v306
      %v878 = vadd.f32 %v877, %v310
      %v879 = vadd.f32 %v878, %v314
      %v880 = vadd.f32 %v879, %v318
      %v881 = vadd.f32 %v880, %v322
      %v882 = vadd.f32 %v881, %v326
      %v883 = vadd.f32 %v882, %v330
      %v884 = vadd.f32 %v883, %v334
      %v885 = vadd.f32 %v884, %v338
      %v886 = vadd.f32 %v885, %v342
      %v887 = vadd.f32 %v886, %v346
      %v888 = vadd.f32 %v887, %v350
      %v889 = vadd.f32 %v888, %v354
      %v890 = vadd.f32 %v889, %v358
      %v891 = vadd.f32 %v890, %v362
      %v892 = vadd.f32 %v891, %v366
      %v893 = vadd.f32 %v892, %v370
      %v894 = vadd.f32 %v893, %v374
      %v895 = vadd.f32 %v894, %v378
      %v896 = vadd.f32 %v895, %v382
      %v897 = vadd.f32 %v896, %v386
      %v898 = vadd.f32 %v897, %v390
      %v899 = vadd.f32 %v898, %v394
      %v900 = vadd.f32 %v899, %v398
      %v901 = vadd.f32 %v900, %v402
      %v902 = vadd.f32 %v901, %v406
      %v903 = vadd.f32 %v902, %v410
      %v904 = vadd.f32 %v903, %v414
      %v905 = vadd.f32 %v904, %v418
      %v906 = vadd.f32 %v905, %v422
      %v907 = vadd.f32 %v906, %v426
      %v908 = vadd.f32 %v907, %v430
      %v909 = vadd.f32 %v908, %v434
      %v910 = vadd.f32 %v909, %v438
      %v911 = vadd.f32 %v910, %v442
      %v912 = vadd.f32 %v911, %v446
      %v913 = vadd.f32 %v912, %v450
      %v914 = vadd.f32 %v913, %v454
      %v915 = vadd.f32 %v914, %v458
      %v916 = vadd.f32 %v915, %v462
      %v917 = vadd.f32 %v916, %v466
      %v918 = vadd.f32 %v917, %v470
      %v919 = vadd.f32 %v918, %v474
      %v920 = vadd.f32 %v919, %v478
      %v921 = vadd.f32 %v920, %v482
      %v922 = vadd.f32 %v921, %v486
      %v923 = vadd.f32 %v922, %v490
      %v924 = vadd.f32 %v923, %v494
      %v925 = vadd.f32 %v924, %v498
      %v926 = vadd.f32 %v925, %v502
      %v927 = vadd.f32 %v926, %v506
      %v928 = vadd.f32 %v927, %v510
      %v929 = vadd.f32 %v928, %v514
      %v930 = vadd.f32 %v929, %v518
      %v931 = vadd.f32 %v930, %v522
      %v932 = vadd.f32 %v931, %v526
      %v933 = vadd.f32 %v932, %v530
      %v934 = vadd.f32 %v933, %v534
      %v935 = vadd.f32 %v934, %v538
      %v936 = vadd.f32 %v935, %v542
      %v937 = vadd.f32 %v936, %v546
      %v938 = vadd.f32 %v937, %v550
      %v939 = vadd.f32 %v938, %v554
      %v940 = vadd.f32 %v939, %v558
      %v941 = vadd.f32 %v51, %v55
      %v942 = vadd.f32 %v941, %v59
      %v943 = vadd.f32 %v942, %v63
      %v944 = vadd.f32 %v943, %v67
      %v945 = vadd.f32 %v944, %v71
      %v946 = vadd.f32 %v945, %v75
      %v947 = vadd.f32 %v946, %v79
      %v948 = vadd.f32 %v947, %v83
      %v949 = vadd.f32 %v948, %v87
      %v950 = vadd.f32 %v949, %v91
      %v951 = vadd.f32 %v950, %v95
      %v952 = vadd.f32 %v951, %v99
      %v953 = vadd.f32 %v952, %v103
      %v954 = vadd.f32 %v953, %v107
      %v955 = vadd.f32 %v954, %v111
      %v956 = vadd.f32 %v955, %v115
      %v957 = vadd.f32 %v956, %v119
      %v958 = vadd.f32 %v957, %v123
      %v959 = vadd.f32 %v958, %v127
      %v960 = vadd.f32 %v959, %v131
      %v961 = vadd.f32 %v960, %v135
      %v962 = vadd.f32 %v961, %v139
      %v963 = vadd.f32 %v962, %v143
      %v964 = vadd.f32 %v963, %v147
      %v965 = vadd.f32 %v964, %v151
      %v966 = vadd.f32 %v965, %v155
      %v967 = vadd.f32 %v966, %v159
      %v968 = vadd.f32 %v967, %v163
      %v969 = vadd.f32 %v968, %v167
      %v970 = vadd.f32 %v969, %v171
      %v971 = vadd.f32 %v970, %v175
      %v972 = vadd.f32 %v971, %v179
      %v973 = vadd.f32 %v972, %v183
      %v974 = vadd.f32 %v973, %v187
      %v975 = vadd.f32 %v974, %v191
      %v976 = vadd.f32 %v975, %v195
      %v977 = vadd.f32 %v976, %v199
      %v978 = vadd.f32 %v977, %v203
      %v979 = vadd.f32 %v978, %v207
      %v980 = vadd.f32 %v979, %v211
      %v981 = vadd.f32 %v980, %v215
      %v982 = vadd.f32 %v981, %v219
      %v983 = vadd.f32 %v982, %v223
      %v984 = vadd.f32 %v983, %v227
      %v985 = vadd.f32 %v984, %v231
      %v986 = vadd.f32 %v985, %v235
      %v987 = vadd.f32 %v986, %v239
      %v988 = vadd.f32 %v987, %v243
      %v989 = vadd.f32 %v988, %v247
      %v990 = vadd.f32 %v989, %v251
      %v991 = vadd.f32 %v990, %v255
      %v992 = vadd.f32 %v991, %v259
      %v993 = vadd.f32 %v992, %v263
      %v994 = vadd.f32 %v993, %v267
      %v995 = vadd.f32 %v994, %v271
      %v996 = vadd.f32 %v995, %v275
      %v997 = vadd.f32 %v996, %v279
      %v998 = vadd.f32 %v997, %v283
      %v999 = vadd.f32 %v998, %v287
      %v1000 = vadd.f32 %v999, %v291
      %v1001 = vadd.f32 %v1000, %v295
      %v1002 = vadd.f32 %v1001, %v299
      %v1003 = vadd.f32 %v1002, %v303
      %v1004 = vadd.f32 %v1003, %v307
      %v1005 = vadd.f32 %v1004, %v311
      %v1006 = vadd.f32 %v1005, %v315
      %v1007 = vadd.f32 %v1006, %v319
      %v1008 = vadd.f32 %v1007, %v323
      %v1009 = vadd.f32 %v1008, %v327
      %v1010 = vadd.f32 %v1009, %v331
      %v1011 = vadd.f32 %v1010, %v335
      %v1012 = vadd.f32 %v1011, %v339
      %v1013 = vadd.f32 %v1012, %v343
      %v1014 = vadd.f32 %v1013, %v347
      %v1015 = vadd.f32 %v1014, %v351
      %v1016 = vadd.f32 %v1015, %v355
      %v1017 = vadd.f32 %v1016, %v359
      %v1018 = vadd.f32 %v1017, %v363
      %v1019 = vadd.f32 %v1018, %v367
      %v1020 = vadd.f32 %v1019, %v371
      %v1021 = vadd.f32 %v1020, %v375
      %v1022 = vadd.f32 %v1021, %v379
      %v1023 = vadd.f32 %v1022, %v383
      %v1024 = vadd.f32 %v1023, %v387
      %v1025 = vadd.f32 %v1024, %v391
      %v1026 = vadd.f32 %v1025, %v395
      %v1027 = vadd.f32 %v1026, %v399
      %v1028 = vadd.f32 %v1027, %v403
      %v1029 = vadd.f32 %v1028, %v407
      %v1030 = vadd.f32 %v1029, %v411
      %v1031 = vadd.f32 %v1030, %v415
      %v1032 = vadd.f32 %v1031, %v419
      %v1033 = vadd.f32 %v1032, %v423
      %v1034 = vadd.f32 %v1033, %v427
      %v1035 = vadd.f32 %v1034, %v431
      %v1036 = vadd.f32 %v1035, %v435
      %v1037 = vadd.f32 %v1036, %v439
      %v1038 = vadd.f32 %v1037, %v443
      %v1039 = vadd.f32 %v1038, %v447
      %v1040 = vadd.f32 %v1039, %v451
      %v1041 = vadd.f32 %v1040, %v455
      %v1042 = vadd.f32 %v1041, %v459
      %v1043 = vadd.f32 %v1042, %v463
      %v1044 = vadd.f32 %v1043, %v467
      %v1045 = vadd.f32 %v1044, %v471
      %v1046 = vadd.f32 %v1045, %v475
      %v1047 = vadd.f32 %v1046, %v479
      %v1048 = vadd.f32 %v1047, %v483
      %v1049 = vadd.f32 %v1048, %v487
      %v1050 = vadd.f32 %v1049, %v491
      %v1051 = vadd.f32 %v1050, %v495
      %v1052 = vadd.f32 %v1051, %v499
      %v1053 = vadd.f32 %v1052, %v503
      %v1054 = vadd.f32 %v1053, %v507
      %v1055 = vadd.f32 %v1054, %v511
      %v1056 = vadd.f32 %v1055, %v515
      %v1057 = vadd.f32 %v1056, %v519
      %v1058 = vadd.f32 %v1057, %v523
      %v1059 = vadd.f32 %v1058, %v527
      %v1060 = vadd.f32 %v1059, %v531
      %v1061 = vadd.f32 %v1060, %v535
      %v1062 = vadd.f32 %v1061, %v539
      %v1063 = vadd.f32 %v1062, %v543
      %v1064 = vadd.f32 %v1063, %v547
      %v1065 = vadd.f32 %v1064, %v551
      %v1066 = vadd.f32 %v1065, %v555
      %v1067 = vadd.f32 %v1066, %v559
      %v1068 = vadd.f32 %v686, 0.0
      %v1069 = vadd.f32 %v813, 0.0
      %v1070 = vadd.f32 %v940, 0.0
      %v1071 = vadd.f32 %v1067, 0.0
      %v1072 = vld [vmem:[#allocation5] sm:$0xff]
      %v1073 = vld [vmem:[#allocation5 + $0x8] sm:$0xff]
      %v1074 = vld [vmem:[#allocation5 + $0x10] sm:$0xff]
      %v1075 = vld [vmem:[#allocation5 + $0x18] sm:$0xff]
      %v1076 = vadd.f32 %v1072, %v1068
      %v1077 = vadd.f32 %v1073, %v1069
      %v1078 = vadd.f32 %v1074, %v1070
      %v1079 = vadd.f32 %v1075, %v1071
      %1080 = vst [vmem:[#allocation5] sm:$0xff] %v1076
      %1081 = vst [vmem:[#allocation5 + $0x8] sm:$0xff] %v1077
      %1082 = vst [vmem:[#allocation5 + $0x10] sm:$0xff] %v1078
      %1083 = vst [vmem:[#allocation5 + $0x18] sm:$0xff] %v1079
    $region17: #{tpu_custom_call.1} parent=1 // pred_fallthru
      _
    %p1084 = scmp.gt.s32.totalorder %s43, 4096
    %p1085 = scmp.lt.s32.totalorder %s42, 4096
    %p1086 = pnand %p1084, %p1085
    %p1087 = pneg %p1086
    // Predicated region
    $region18: #{tpu_custom_call.1} parent=1 // pred_check
      _
    $region19: #{tpu_custom_call.1} parent=1 // pred_check_branch
      %1089 = sbr.rel (%p1086) target = $region21
    $region20: #{tpu_custom_call.1} parent=1 // pred_region
      loop: start=0, step=1, limit=128
      $region22: #{tpu_custom_call.1} parent=20 // loop_pre_header
        _
      $region23: #{tpu_custom_call.1} parent=20 // loop_header
        %s1091 = sphi 0, %s1095
        %p1092 = scmp.ge.s32.totalorder %s1091, 128
      $region24: #{tpu_custom_call.1} parent=20 // loop_header_branch
        %1094 = sbr.rel (%p1092) target = $region28
      $region25: #{tpu_custom_call.1} parent=20 // loop_body
        %s1096 = smul.u32 %s1091, 32
        %s1097 = sadd.s32 %s42, %s1096
        %s1098 = sadd.s32 %s1097, 32
        %p1099 = scmp.le.s32.totalorder %s1098, 4096
        // Predicated region
        $region29: #{tpu_custom_call.1} parent=25 // pred_check
          %p1100 = pneg %p1099
        $region30: #{tpu_custom_call.1} parent=25 // pred_check_branch
          %1102 = sbr.rel (%p1100) target = $region32
        $region31: #{tpu_custom_call.1} parent=25 // pred_region
          %v1103 = vld [vmem:[#allocation5] sm:$0xff]
          %v1104 = vld [vmem:[#allocation5 + $0x8] sm:$0xff]
          %v1105 = vld [vmem:[#allocation5 + $0x10] sm:$0xff]
          %v1106 = vld [vmem:[#allocation5 + $0x18] sm:$0xff]
          %s1107 = scalar_lea.vmem [#allocation2], %s1096
          %v1108 = vld [vmem:[%s1107] sm:$0xff]
          %v1109 = vld [vmem:[%s1107 + $0x8] sm:$0xff]
          %v1110 = vld [vmem:[%s1107 + $0x10] sm:$0xff]
          %v1111 = vld [vmem:[%s1107 + $0x18] sm:$0xff]
          %v1112 = vadd.f32 %v1103, %v1108
          %v1113 = vadd.f32 %v1104, %v1109
          %v1114 = vadd.f32 %v1105, %v1110
          %v1115 = vadd.f32 %v1106, %v1111
          %1116 = vst [vmem:[#allocation5] sm:$0xff] %v1112
          %1117 = vst [vmem:[#allocation5 + $0x8] sm:$0xff] %v1113
          %1118 = vst [vmem:[#allocation5 + $0x10] sm:$0xff] %v1114
          %1119 = vst [vmem:[#allocation5 + $0x18] sm:$0xff] %v1115
        $region32: #{tpu_custom_call.1} parent=25 // pred_fallthru
          _
        %p1120 = scmp.lt.s32.totalorder %s1097, 4096
        %p1121 = scmp.gt.s32.totalorder %s1098, 4096
        %p1122 = pnand %p1120, %p1121
        %p1123 = pneg %p1122
        // Predicated region
        $region33: #{tpu_custom_call.1} parent=25 // pred_check
          _
        $region34: #{tpu_custom_call.1} parent=25 // pred_check_branch
          %1125 = sbr.rel (%p1122) target = $region36
        $region35: #{tpu_custom_call.1} parent=25 // pred_region
          %v1126 = vlaneseq
          %v1127 = vshrl.u32 %v1126, 7
          %v1128 = vadd.s32 %v1127, 8
          %v1129 = vadd.s32 %v1127, 16
          %v1130 = vadd.s32 %v1127, 24
          %v1131 = vstv %s1097
          %v1132 = vadd.s32 %v1127, %v1131
          %v1133 = vadd.s32 %v1128, %v1131
          %v1134 = vadd.s32 %v1129, %v1131
          %v1135 = vadd.s32 %v1130, %v1131
          %s1136 = scalar_lea.vmem [#allocation2], %s1096
          %v1137 = vld [vmem:[%s1136] sm:$0xff]
          %v1138 = vld [vmem:[%s1136 + $0x8] sm:$0xff]
          %v1139 = vld [vmem:[%s1136 + $0x10] sm:$0xff]
          %v1140 = vld [vmem:[%s1136 + $0x18] sm:$0xff]
          %v1141 = vld [vmem:[#allocation5] sm:$0xff]
          %v1142 = vld [vmem:[#allocation5 + $0x8] sm:$0xff]
          %v1143 = vld [vmem:[#allocation5 + $0x10] sm:$0xff]
          %v1144 = vld [vmem:[#allocation5 + $0x18] sm:$0xff]
          %vm1145 = vcmp.lt.s32.totalorder %v1132, 4096
          %vm1146 = vcmp.lt.s32.totalorder %v1133, 4096
          %vm1147 = vcmp.lt.s32.totalorder %v1134, 4096
          %vm1148 = vcmp.lt.s32.totalorder %v1135, 4096
          %v1149 = vsel %vm1145, %v1137, 0.0
          %v1150 = vsel %vm1146, %v1138, 0.0
          %v1151 = vsel %vm1147, %v1139, 0.0
          %v1152 = vsel %vm1148, %v1140, 0.0
          %v1153 = vadd.f32 %v1141, %v1149
          %v1154 = vadd.f32 %v1142, %v1150
          %v1155 = vadd.f32 %v1143, %v1151
          %v1156 = vadd.f32 %v1144, %v1152
          %1157 = vst [vmem:[#allocation5] sm:$0xff] %v1153
          %1158 = vst [vmem:[#allocation5 + $0x8] sm:$0xff] %v1154
          %1159 = vst [vmem:[#allocation5 + $0x10] sm:$0xff] %v1155
          %1160 = vst [vmem:[#allocation5 + $0x18] sm:$0xff] %v1156
        $region36: #{tpu_custom_call.1} parent=25 // pred_fallthru
          _
      $region26: #{tpu_custom_call.1} parent=20 // loop_footer
        %s1095 = sadd.s32 1, %s1091
      $region27: #{tpu_custom_call.1} parent=20 // loop_footer_branch
        %1090 = sbr.rel target = $region23
      $region28: #{tpu_custom_call.1} parent=20 // loop_exit
        _
    $region21: #{tpu_custom_call.1} parent=1 // pred_fallthru
      _
    // Predicated region
    $region37: #{tpu_custom_call.1} parent=1 // pred_check
      _
    $region38: #{tpu_custom_call.1} parent=1 // pred_check_branch
      %1162 = sbr.rel (0) target = $region40
    $region39: #{tpu_custom_call.1} parent=1 // pred_region
      %s1164 = ssub.s32 512, 512
      %1165 = vsyncadd [#allocation4], %s1164
      %s1166 = sshll.u32 [#allocation5], 4
      %s1167 = int_to_ptr.vmem [resolvable:$true] %s1166
      %1172 = dma.vmem_to_hbm [thread:$0]  %s1167, 512, %s1, [#allocation4], 128, 128, 8
    $region40: #{tpu_custom_call.1} parent=1 // pred_fallthru
      _
    // Predicated region
    $region41: #{tpu_custom_call.1} parent=1 // pred_check
      _
    $region42: #{tpu_custom_call.1} parent=1 // pred_check_branch
      %1174 = sbr.rel (0) target = $region44
    $region43: #{tpu_custom_call.1} parent=1 // pred_region
      %1175 = dma.done [#allocation4], 512
    $region44: #{tpu_custom_call.1} parent=1 // pred_fallthru
      _
    %1176 = vsyncpa [#allocation3], 1
    %1177 = vsyncpa [#allocation4], 1

</llo_original>
